<compile_context>
chip_gen: v5e
topology: v5e:2x2
jax: 0.10.0
libtpu: 0.0.40
codegen_flags: <defaults>
</compile_context>

<pallas_src>
import functools

import jax
import jax.numpy as jnp
from jax.experimental import pallas as pl
from jax.experimental.pallas import tpu as pltpu


def _round_up(a, m):
    return ((a + m - 1) // m) * m


# ----------------------------------------------------------------------------
# In-kernel helpers
# ----------------------------------------------------------------------------
def _stack_3x3_taps_bf16(x2d, col, H, W, cp):
    """Fused im2col for a VMEM-resident tile, producing a bf16 operand.

    x2d : (C, N) f32, spatial row-major (N = H*W).
    col : (1, N) int32 iota % W (precomputed once per kernel invocation).
    cp  : C rounded up to 16 (bf16 sublane tile) -> every bf16 concat below is
          tile-aligned.  The extra rows are zeros and match zero weight columns.

    Returns (9*cp, N) bf16: the 9 zero-padded shifted taps stacked along sublanes,
    ordered (kh, kw, c) to match an OIHW weight reshaped via transpose(0, 2, 3, 1).
    """
    C, N = x2d.shape
    if cp > C:  # pad channels once, in f32 (8-row aligned), before the bf16 cast
        x2d = jnp.concatenate([x2d, jnp.zeros((cp - C, N), x2d.dtype)], axis=0)
    xb = x2d.astype(jnp.bfloat16)                            # single cast, bf16 from here on

    # Lane-aligned zero halo big enough for a +/- (W+1) shift; rows that fall outside
    # the image land in the halo automatically, only column wrap needs masking.
    pad = ((W + 1 + 127) // 128) * 128
    zeros = jnp.zeros((cp, pad), jnp.bfloat16)
    xpad = jnp.concatenate([zeros, xb, zeros], axis=1)       # (cp, N + 2*pad) bf16

    taps = []
    for dh in (-1, 0, 1):
        for dw in (-1, 0, 1):
            start = pad + dh * W + dw                        # static python int
            tap = xpad[:, start:start + N]                   # (cp, N) bf16
            if dw != 0:
                ok = (col + dw >= 0) & (col + dw < W)        # (1, N) column validity
                tap = jnp.where(ok, tap, 0)
            taps.append(tap)
    return jnp.concatenate(taps, axis=0)                     # (9*cp, N) bf16, tile-aligned


# ----------------------------------------------------------------------------
# Fused residual-block kernel (one batch element per grid step)
# ----------------------------------------------------------------------------
def residual_block_kernel(x_ref, w1_ref, s1_ref, b1_ref,
                          w2_ref, s2_ref, b2_ref,
                          wvqk_ref, bvqk_ref, gamma_ref, out_ref,
                          *, H, W, co, cq, cp_in, cp_mid):
    N = H * W
    x0 = x_ref[0]                                            # (C, N) f32
    col = jax.lax.broadcasted_iota(jnp.int32, (1, N), 1) % W

    # --- conv1 (3x3, no bias) + BN1 + ReLU : one K = 9*cp_in matmul ----------
    p1 = _stack_3x3_taps_bf16(x0, col, H, W, cp_in)                       # (9*cp_in, N) bf16
    h1 = jnp.dot(w1_ref[...], p1, preferred_element_type=jnp.float32)     # (O, N) f32
    h1 = jnp.maximum(h1 * s1_ref[...] + b1_ref[...], 0.0)

    # --- conv2 (3x3, no bias) + BN2 ------------------------------------------
    p2 = _stack_3x3_taps_bf16(h1, col, H, W, cp_mid)                      # (9*cp_mid, N) bf16
    h2 = jnp.dot(w2_ref[...], p2, preferred_element_type=jnp.float32)     # (O, N) f32
    h2 = h2 * s2_ref[...] + b2_ref[...]

    # --- self-attention: fused V/Q/K 1x1 convs (one matmul) ------------------
    vqk = jnp.dot(wvqk_ref[...], h2.astype(jnp.bfloat16),
                  preferred_element_type=jnp.float32) + bvqk_ref[...]     # (O+2Cq, N) f32
    v = vqk[0:co, :]                                                      # (O,  N)
    q = vqk[co:co + cq, :]                                                # (Cq, N)
    k = vqk[co + cq:co + 2 * cq, :]                                       # (Cq, N)

    # [R2] key-major scores: scores_t[j, i] = sum_c k[c, j] * q[c, i]  (keys on sublanes,
    # queries on lanes) -> softmax reduces over axis 0 and P*V needs no (N, N) transpose.
    scores_t = jax.lax.dot_general(
        k.astype(jnp.bfloat16), q.astype(jnp.bfloat16),
        (((0,), (0,)), ((), ())), preferred_element_type=jnp.float32)     # (Nk, Nq) f32
    e = jnp.exp(scores_t - jnp.max(scores_t, axis=0, keepdims=True))      # (Nk, Nq) f32
    l = jnp.sum(e, axis=0, keepdims=True)                                 # (1, Nq)  f32

    # [R1] deferred normalization: P*V on the un-normalized exponentials, then scale the
    # small (O, N) result by 1/l (EUP approx reciprocal; documented deviation from the
    # exact f32 softmax of PyTorch, covered by the tolerance checks below).
    pv = jnp.dot(v.astype(jnp.bfloat16), e.astype(jnp.bfloat16),
                 preferred_element_type=jnp.float32)                      # (O, Nq) f32
    attn_out = pv * pl.reciprocal(l, approx=True)

    # gamma * attn_out + (attention input) + (block residual), then ReLU.
    y = gamma_ref[0] * attn_out + h2 + x0                                 # gamma from SMEM
    out_ref[0] = jnp.maximum(y, 0.0).astype(out_ref.dtype)


# ----------------------------------------------------------------------------
# One-time parameter preparation (hoisted out of the jitted forward) [R13]
# ----------------------------------------------------------------------------
def prepare_params(params):
    """Pack / transpose / cast weights once at load time (not inside every forward)."""
    O, C = params["conv1_w"].shape[:2]
    cp_in = _round_up(C, 16)       # bf16 sublane tile -> aligned in-kernel tap stacking
    cp_mid = _round_up(O, 16)
    mmt = jnp.bfloat16

    def prep_conv(w, cp):
        o, ci = w.shape[:2]
        w = jnp.transpose(w, (0, 2, 3, 1))                    # OIHW -> (O, kh, kw, Ci)
        w = jnp.pad(w, ((0, 0), (0, 0), (0, 0), (0, cp - ci)))  # zero cols for padded taps
        return w.reshape(o, 9 * cp).astype(mmt)

    return dict(
        w1=prep_conv(params["conv1_w"], cp_in),
        w2=prep_conv(params["conv2_w"], cp_mid),
        wvqk=jnp.concatenate([params["wv"], params["wq"], params["wk"]],
                             axis=0).astype(mmt),
        bvqk=jnp.concatenate([params["bv"], params["bq"], params["bk"]],
                             axis=0).reshape(-1, 1).astype(jnp.float32),
        s1=params["bn1_scale"].reshape(O, 1).astype(jnp.float32),
        b1=params["bn1_shift"].reshape(O, 1).astype(jnp.float32),
        s2=params["bn2_scale"].reshape(O, 1).astype(jnp.float32),
        b2=params["bn2_shift"].reshape(O, 1).astype(jnp.float32),
        gamma=params["gamma"].reshape(1).astype(jnp.float32),
    )


def _vmem_limit_bytes(C, O, Cq, N, cp_in, cp_mid):
    """Working-set estimate for an explicit scoped-VMEM limit [R7]."""
    f32, bf16 = 4, 2
    est = 0
    est += 2 * (C + O) * N * f32                               # double-buffered I/O tiles
    est += 2 * (9 * cp_in * O + 9 * cp_mid * O + (O + 2 * Cq) * O) * bf16   # weights
    est += 3 * 9 * max(cp_in, cp_mid) * N * bf16               # tap slab + halo + shifted copies
    est += 2 * N * N * f32 + N * N * bf16                      # scores_t, e (f32), e (bf16)
    est += 8 * O * N * f32                                     # h1/h2/vqk/pv/attn temporaries
    est = int(est * 1.5) + (4 << 20)
    # Floor at 32 MiB (>= defaults everywhere), cap at 96 MiB (v5e/v6e physical is 128 MiB;
    # on v7x (64 MiB physical) large N needs the flash-tiled variant anyway -> see TODO).
    return max(32 << 20, min(est, 96 << 20))


# ----------------------------------------------------------------------------
# Wrapper
# ----------------------------------------------------------------------------
def residual_block_forward(x, prepped):
    """Pallas implementation of ResidualBlock.forward (stride=1, downsample=None)."""
    B, C, H, W = x.shape
    N = H * W
    O = prepped["s1"].shape[0]
    Cq = (prepped["wvqk"].shape[0] - O) // 2
    cp_in = prepped["w1"].shape[1] // 9
    cp_mid = prepped["w2"].shape[1] // 9
    assert C == O, "identity residual path requires in_channels == out_channels"
    assert Cq >= 1, "out_channels must be >= 8 (Cq = out_channels // 8)"

    xf = x.reshape(B, C, N)                                  # free reshape (no transpose)
    kernel = functools.partial(residual_block_kernel, H=H, W=W, co=O, cq=Cq,
                               cp_in=cp_in, cp_mid=cp_mid)

    out = pl.pallas_call(
        kernel,
        grid=(B,),
        in_specs=[
            pl.BlockSpec((1, C, N), lambda b: (b, 0, 0)),            # x
            pl.BlockSpec((O, 9 * cp_in), lambda b: (0, 0)),          # conv1 weight (bf16)
            pl.BlockSpec((O, 1), lambda b: (0, 0)),                  # bn1 scale
            pl.BlockSpec((O, 1), lambda b: (0, 0)),                  # bn1 shift
            pl.BlockSpec((O, 9 * cp_mid), lambda b: (0, 0)),         # conv2 weight (bf16)
            pl.BlockSpec((O, 1), lambda b: (0, 0)),                  # bn2 scale
            pl.BlockSpec((O, 1), lambda b: (0, 0)),                  # bn2 shift
            pl.BlockSpec((O + 2 * Cq, O), lambda b: (0, 0)),         # fused V/Q/K weight
            pl.BlockSpec((O + 2 * Cq, 1), lambda b: (0, 0)),         # fused V/Q/K bias
            pl.BlockSpec(memory_space=pltpu.MemorySpace.SMEM),       # gamma (scalar) [R13]
        ],
        out_specs=pl.BlockSpec((1, O, N), lambda b: (b, 0, 0)),
        out_shape=jax.ShapeDtypeStruct((B, O, N), jnp.float32),
        compiler_params=pltpu.CompilerParams(
            dimension_semantics=("parallel",),
            vmem_limit_bytes=_vmem_limit_bytes(C, O, Cq, N, cp_in, cp_mid),
        ),
    )(xf, prepped["w1"], prepped["s1"], prepped["b1"],
      prepped["w2"], prepped["s2"], prepped["b2"],
      prepped["wvqk"], prepped["bvqk"], prepped["gamma"])
    return out.reshape(B, O, H, W)                           # free reshape (no transpose)


# ----------------------------------------------------------------------------
# Pure-JAX references (verification only).  `mm_dtype=bf16` mirrors the kernel's
# bf16-operand / f32-accumulate matmuls; `mm_dtype=f32` is the exact PyTorch math.
# ----------------------------------------------------------------------------
def residual_block_reference(x, p, mm_dtype):
    f32 = jnp.float32

    def conv3x3(xx, w):
        return jax.lax.conv_general_dilated(
            xx.astype(mm_dtype), w.astype(mm_dtype), (1, 1), "SAME",
            dimension_numbers=("NCHW", "OIHW", "NCHW"),
            preferred_element_type=f32)

    h = conv3x3(x, p["conv1_w"])
    h = h * p["bn1_scale"][None, :, None, None] + p["bn1_shift"][None, :, None, None]
    h = jnp.maximum(h, 0.0)
    h2 = conv3x3(h, p["conv2_w"])
    h2 = h2 * p["bn2_scale"][None, :, None, None] + p["bn2_shift"][None, :, None, None]

    B, C, H, W = h2.shape
    N = H * W
    xf = h2.reshape(B, C, N)
    q = jnp.einsum("qc,bcn->bqn", p["wq"].astype(mm_dtype), xf.astype(mm_dtype),
                   preferred_element_type=f32) + p["bq"][None, :, None]
    k = jnp.einsum("qc,bcn->bqn", p["wk"].astype(mm_dtype), xf.astype(mm_dtype),
                   preferred_element_type=f32) + p["bk"][None, :, None]
    v = jnp.einsum("oc,bcn->bon", p["wv"].astype(mm_dtype), xf.astype(mm_dtype),
                   preferred_element_type=f32) + p["bv"][None, :, None]
    scores = jnp.einsum("bci,bcj->bij", q.astype(mm_dtype), k.astype(mm_dtype),
                        preferred_element_type=f32)
    attn = jax.nn.softmax(scores, axis=-1)
    att_out = jnp.einsum("bcj,bij->bci", v.astype(mm_dtype), attn.astype(mm_dtype),
                         preferred_element_type=f32)
    out = (p["gamma"][0] * att_out + xf).reshape(B, C, H, W)
    out = out + x
    return jnp.maximum(out, 0.0)


# ----------------------------------------------------------------------------
# Parameter init (deterministic, matching PyTorch module shapes)
# ----------------------------------------------------------------------------
def init_params(key, in_channels, out_channels):
    C, O = in_channels, out_channels
    Cq = O // 8
    eps = 1e-5
    ks = jax.random.split(key, 12)

    conv1_w = 0.1 * jax.random.normal(ks[0], (O, C, 3, 3), jnp.float32)
    conv2_w = 0.1 * jax.random.normal(ks[1], (O, O, 3, 3), jnp.float32)

    def bn_params(k):
        kw, kb, km, kv = jax.random.split(k, 4)
        weight = 1.0 + 0.1 * jax.random.normal(kw, (O,), jnp.float32)
        bias = 0.1 * jax.random.normal(kb, (O,), jnp.float32)
        running_mean = 0.1 * jax.random.normal(km, (O,), jnp.float32)
        running_var = jax.random.uniform(kv, (O,), jnp.float32, 0.5, 1.5)
        scale = weight / jnp.sqrt(running_var + eps)
        shift = bias - running_mean * scale
        return scale, shift

    bn1_scale, bn1_shift = bn_params(ks[2])
    bn2_scale, bn2_shift = bn_params(ks[3])

    wq = 0.1 * jax.random.normal(ks[4], (Cq, O), jnp.float32)
    bq = 0.1 * jax.random.normal(ks[5], (Cq,), jnp.float32)
    wk = 0.1 * jax.random.normal(ks[6], (Cq, O), jnp.float32)
    bk = 0.1 * jax.random.normal(ks[7], (Cq,), jnp.float32)
    wv = 0.1 * jax.random.normal(ks[8], (O, O), jnp.float32)
    bv = 0.1 * jax.random.normal(ks[9], (O,), jnp.float32)
    gamma = jnp.zeros((1,), jnp.float32)   # nn.Parameter(torch.zeros(1)) in __init__

    return dict(conv1_w=conv1_w, conv2_w=conv2_w,
                bn1_scale=bn1_scale, bn1_shift=bn1_shift,
                bn2_scale=bn2_scale, bn2_shift=bn2_shift,
                wq=wq, bq=bq, wk=wk, bk=bk, wv=wv, bv=bv, gamma=gamma)


# ----------------------------------------------------------------------------
if __name__ == "__main__":
    B, C, H, W = 2, 8, 16, 16     # in_channels == out_channels, stride=1, downsample=None
    key = jax.random.PRNGKey(0)
    kx, kp = jax.random.split(key)
    x = jax.random.normal(kx, (B, C, H, W), jnp.float32)
    params = init_params(kp, C, C)
    # gamma is zero-initialized in the PyTorch module; use a nonzero value here so the
    # correctness checks actually exercise the attention path (scores / softmax / P*V).
    params["gamma"] = jnp.full((1,), 0.5, jnp.float32)

    prepped = prepare_params(params)          # one-time weight prep, outside the jit
    fwd = jax.jit(residual_block_forward)
    out = jax.block_until_ready(fwd(x, prepped))
    assert out.shape == (B, C, H, W)

    # Tight check vs a reference with identical bf16-operand / f32-accumulate matmuls.
    ref_bf16 = residual_block_reference(x, params, jnp.bfloat16)
    assert bool(jnp.allclose(out, ref_bf16, atol=1e-2, rtol=1e-2)), \
        "mismatch vs structured (bf16 matmul) reference"

    # Loose sanity check vs the exact f32 math of the PyTorch module.
    ref_f32 = residual_block_reference(x, params, jnp.float32)
    assert bool(jnp.allclose(out, ref_f32, atol=1e-1, rtol=1e-1)), \
        "mismatch vs f32 reference"

    print("KERNEL_OK")
</pallas_src>

<mosaic_0001>
module attributes {stable_mosaic.version = 11 : i64} {
  func.func @residual_block_kernel(%arg0: i32, %arg1: memref<1x8x256xf32, #tpu.memory_space<vmem>>, %arg2: memref<8x144xbf16, #tpu.memory_space<vmem>>, %arg3: memref<8x1xf32, #tpu.memory_space<vmem>>, %arg4: memref<8x1xf32, #tpu.memory_space<vmem>>, %arg5: memref<8x144xbf16, #tpu.memory_space<vmem>>, %arg6: memref<8x1xf32, #tpu.memory_space<vmem>>, %arg7: memref<8x1xf32, #tpu.memory_space<vmem>>, %arg8: memref<10x8xbf16, #tpu.memory_space<vmem>>, %arg9: memref<10x1xf32, #tpu.memory_space<vmem>>, %arg10: memref<1xf32, #tpu.memory_space<smem>>, %arg11: memref<1x8x256xf32, #tpu.memory_space<vmem>>) attributes {dimension_semantics = [#tpu.dimension_semantics<parallel>], iteration_bounds = array<i64: 2>, scalar_prefetch = 0 : i64, scratch_operands = 0 : i64, tpu.core_type = #tpu.core_type<tc>, window_params = [{transform_indices = @transform_0, window_bounds = array<i64: 1, 8, 256>}, {pipeline_mode = #tpu.pipeline_mode<synchronous>, transform_indices = @transform_1, window_bounds = array<i64: 8, 144>}, {pipeline_mode = #tpu.pipeline_mode<synchronous>, transform_indices = @transform_2, window_bounds = array<i64: 8, 1>}, {pipeline_mode = #tpu.pipeline_mode<synchronous>, transform_indices = @transform_3, window_bounds = array<i64: 8, 1>}, {pipeline_mode = #tpu.pipeline_mode<synchronous>, transform_indices = @transform_4, window_bounds = array<i64: 8, 144>}, {pipeline_mode = #tpu.pipeline_mode<synchronous>, transform_indices = @transform_5, window_bounds = array<i64: 8, 1>}, {pipeline_mode = #tpu.pipeline_mode<synchronous>, transform_indices = @transform_6, window_bounds = array<i64: 8, 1>}, {pipeline_mode = #tpu.pipeline_mode<synchronous>, transform_indices = @transform_7, window_bounds = array<i64: 10, 8>}, {pipeline_mode = #tpu.pipeline_mode<synchronous>, transform_indices = @transform_8, window_bounds = array<i64: 10, 1>}, {transform_indices = @transform_9, window_bounds = array<i64: 1>}, {transform_indices = @transform_10, window_bounds = array<i64: 1, 8, 256>}]} {
    %c0 = arith.constant 0 : index
    %c0_0 = arith.constant 0 : index
    %c0_1 = arith.constant 0 : index
    %0 = vector.load %arg1[%c0, %c0_0, %c0_1] : memref<1x8x256xf32, #tpu.memory_space<vmem>>, vector<1x8x256xf32>
    %1 = vector.shape_cast %0 : vector<1x8x256xf32> to vector<8x256xf32>
    %2 = tpu.iota {dimensions = array<i32: 1>} : vector<1x256xi32>
    %c16_i32 = arith.constant 16 : i32
    %c0_i32 = arith.constant 0 : i32
    %3 = arith.cmpi eq, %c16_i32, %c0_i32 : i32
    %c1_i32 = arith.constant 1 : i32
    %4 = arith.select %3, %c1_i32, %c16_i32 : i32
    %5 = vector.broadcast %4 : i32 to vector<1x256xi32>
    %6 = arith.remsi %2, %5 : vector<1x256xi32>
    %c0_i32_2 = arith.constant 0 : i32
    %7 = vector.broadcast %c0_i32_2 : i32 to vector<1x256xi32>
    %8 = arith.cmpi ne, %6, %7 : vector<1x256xi32>
    %c0_i32_3 = arith.constant 0 : i32
    %9 = vector.broadcast %c0_i32_3 : i32 to vector<1x256xi32>
    %10 = arith.cmpi slt, %6, %9 : vector<1x256xi32>
    %c0_i32_4 = arith.constant 0 : i32
    %11 = arith.cmpi slt, %4, %c0_i32_4 : i32
    %12 = vector.broadcast %11 : i1 to vector<1x256xi1>
    %13 = vector.broadcast %12 : vector<1x256xi1> to vector<1x256xi1>
    %14 = arith.xori %10, %13 : vector<1x256xi1>
    %15 = arith.andi %14, %8 : vector<1x256xi1>
    %16 = vector.broadcast %4 : i32 to vector<1x256xi32>
    %17 = arith.addi %6, %16 : vector<1x256xi32>
    %18 = arith.select %15, %17, %6 : vector<1x256xi1>, vector<1x256xi32>
    %cst = arith.constant 0.000000e+00 : f32
    %19 = vector.broadcast %cst : f32 to vector<8x256xf32>
    %20 = tpu.concatenate %1, %19 in 0 : vector<8x256xf32>, vector<8x256xf32> -> vector<16x256xf32>
    %21 = arith.truncf %20 : vector<16x256xf32> to vector<16x256xbf16>
    %cst_5 = arith.constant 0.000000e+00 : bf16
    %22 = vector.broadcast %cst_5 : bf16 to vector<16x128xbf16>
    %23 = tpu.concatenate %22, %21, %22 in 1 : vector<16x128xbf16>, vector<16x256xbf16>, vector<16x128xbf16> -> vector<16x512xbf16>
    %24 = vector.extract_strided_slice %23 {offsets = [0, 111], sizes = [16, 256], strides = [1, 1]} : vector<16x512xbf16> to vector<16x256xbf16>
    %c-1_i32 = arith.constant -1 : i32
    %25 = vector.broadcast %c-1_i32 : i32 to vector<1x256xi32>
    %26 = arith.addi %18, %25 : vector<1x256xi32>
    %c0_i32_6 = arith.constant 0 : i32
    %27 = vector.broadcast %c0_i32_6 : i32 to vector<1x256xi32>
    %28 = arith.cmpi sge, %26, %27 : vector<1x256xi32>
    %c-1_i32_7 = arith.constant -1 : i32
    %29 = vector.broadcast %c-1_i32_7 : i32 to vector<1x256xi32>
    %30 = arith.addi %18, %29 : vector<1x256xi32>
    %c16_i32_8 = arith.constant 16 : i32
    %31 = vector.broadcast %c16_i32_8 : i32 to vector<1x256xi32>
    %32 = arith.cmpi slt, %30, %31 : vector<1x256xi32>
    %33 = arith.andi %28, %32 : vector<1x256xi1>
    %c0_i32_9 = arith.constant 0 : i32
    %34 = arith.sitofp %c0_i32_9 : i32 to bf16
    %35 = vector.shape_cast %33 : vector<1x256xi1> to vector<1x256xi1>
    %36 = vector.broadcast %35 : vector<1x256xi1> to vector<16x256xi1>
    %37 = vector.broadcast %34 : bf16 to vector<16x256xbf16>
    %38 = arith.select %36, %24, %37 : vector<16x256xi1>, vector<16x256xbf16>
    %39 = vector.extract_strided_slice %23 {offsets = [0, 112], sizes = [16, 256], strides = [1, 1]} : vector<16x512xbf16> to vector<16x256xbf16>
    %40 = vector.extract_strided_slice %23 {offsets = [0, 113], sizes = [16, 256], strides = [1, 1]} : vector<16x512xbf16> to vector<16x256xbf16>
    %c1_i32_10 = arith.constant 1 : i32
    %41 = vector.broadcast %c1_i32_10 : i32 to vector<1x256xi32>
    %42 = arith.addi %18, %41 : vector<1x256xi32>
    %c0_i32_11 = arith.constant 0 : i32
    %43 = vector.broadcast %c0_i32_11 : i32 to vector<1x256xi32>
    %44 = arith.cmpi sge, %42, %43 : vector<1x256xi32>
    %c1_i32_12 = arith.constant 1 : i32
    %45 = vector.broadcast %c1_i32_12 : i32 to vector<1x256xi32>
    %46 = arith.addi %18, %45 : vector<1x256xi32>
    %c16_i32_13 = arith.constant 16 : i32
    %47 = vector.broadcast %c16_i32_13 : i32 to vector<1x256xi32>
    %48 = arith.cmpi slt, %46, %47 : vector<1x256xi32>
    %49 = arith.andi %44, %48 : vector<1x256xi1>
    %c0_i32_14 = arith.constant 0 : i32
    %50 = arith.sitofp %c0_i32_14 : i32 to bf16
    %51 = vector.shape_cast %49 : vector<1x256xi1> to vector<1x256xi1>
    %52 = vector.broadcast %51 : vector<1x256xi1> to vector<16x256xi1>
    %53 = vector.broadcast %50 : bf16 to vector<16x256xbf16>
    %54 = arith.select %52, %40, %53 : vector<16x256xi1>, vector<16x256xbf16>
    %55 = vector.extract_strided_slice %23 {offsets = [0, 127], sizes = [16, 256], strides = [1, 1]} : vector<16x512xbf16> to vector<16x256xbf16>
    %c-1_i32_15 = arith.constant -1 : i32
    %56 = vector.broadcast %c-1_i32_15 : i32 to vector<1x256xi32>
    %57 = arith.addi %18, %56 : vector<1x256xi32>
    %c0_i32_16 = arith.constant 0 : i32
    %58 = vector.broadcast %c0_i32_16 : i32 to vector<1x256xi32>
    %59 = arith.cmpi sge, %57, %58 : vector<1x256xi32>
    %c-1_i32_17 = arith.constant -1 : i32
    %60 = vector.broadcast %c-1_i32_17 : i32 to vector<1x256xi32>
    %61 = arith.addi %18, %60 : vector<1x256xi32>
    %c16_i32_18 = arith.constant 16 : i32
    %62 = vector.broadcast %c16_i32_18 : i32 to vector<1x256xi32>
    %63 = arith.cmpi slt, %61, %62 : vector<1x256xi32>
    %64 = arith.andi %59, %63 : vector<1x256xi1>
    %c0_i32_19 = arith.constant 0 : i32
    %65 = arith.sitofp %c0_i32_19 : i32 to bf16
    %66 = vector.shape_cast %64 : vector<1x256xi1> to vector<1x256xi1>
    %67 = vector.broadcast %66 : vector<1x256xi1> to vector<16x256xi1>
    %68 = vector.broadcast %65 : bf16 to vector<16x256xbf16>
    %69 = arith.select %67, %55, %68 : vector<16x256xi1>, vector<16x256xbf16>
    %70 = vector.extract_strided_slice %23 {offsets = [0, 128], sizes = [16, 256], strides = [1, 1]} : vector<16x512xbf16> to vector<16x256xbf16>
    %71 = vector.extract_strided_slice %23 {offsets = [0, 129], sizes = [16, 256], strides = [1, 1]} : vector<16x512xbf16> to vector<16x256xbf16>
    %c1_i32_20 = arith.constant 1 : i32
    %72 = vector.broadcast %c1_i32_20 : i32 to vector<1x256xi32>
    %73 = arith.addi %18, %72 : vector<1x256xi32>
    %c0_i32_21 = arith.constant 0 : i32
    %74 = vector.broadcast %c0_i32_21 : i32 to vector<1x256xi32>
    %75 = arith.cmpi sge, %73, %74 : vector<1x256xi32>
    %c1_i32_22 = arith.constant 1 : i32
    %76 = vector.broadcast %c1_i32_22 : i32 to vector<1x256xi32>
    %77 = arith.addi %18, %76 : vector<1x256xi32>
    %c16_i32_23 = arith.constant 16 : i32
    %78 = vector.broadcast %c16_i32_23 : i32 to vector<1x256xi32>
    %79 = arith.cmpi slt, %77, %78 : vector<1x256xi32>
    %80 = arith.andi %75, %79 : vector<1x256xi1>
    %c0_i32_24 = arith.constant 0 : i32
    %81 = arith.sitofp %c0_i32_24 : i32 to bf16
    %82 = vector.shape_cast %80 : vector<1x256xi1> to vector<1x256xi1>
    %83 = vector.broadcast %82 : vector<1x256xi1> to vector<16x256xi1>
    %84 = vector.broadcast %81 : bf16 to vector<16x256xbf16>
    %85 = arith.select %83, %71, %84 : vector<16x256xi1>, vector<16x256xbf16>
    %86 = vector.extract_strided_slice %23 {offsets = [0, 143], sizes = [16, 256], strides = [1, 1]} : vector<16x512xbf16> to vector<16x256xbf16>
    %c-1_i32_25 = arith.constant -1 : i32
    %87 = vector.broadcast %c-1_i32_25 : i32 to vector<1x256xi32>
    %88 = arith.addi %18, %87 : vector<1x256xi32>
    %c0_i32_26 = arith.constant 0 : i32
    %89 = vector.broadcast %c0_i32_26 : i32 to vector<1x256xi32>
    %90 = arith.cmpi sge, %88, %89 : vector<1x256xi32>
    %c-1_i32_27 = arith.constant -1 : i32
    %91 = vector.broadcast %c-1_i32_27 : i32 to vector<1x256xi32>
    %92 = arith.addi %18, %91 : vector<1x256xi32>
    %c16_i32_28 = arith.constant 16 : i32
    %93 = vector.broadcast %c16_i32_28 : i32 to vector<1x256xi32>
    %94 = arith.cmpi slt, %92, %93 : vector<1x256xi32>
    %95 = arith.andi %90, %94 : vector<1x256xi1>
    %c0_i32_29 = arith.constant 0 : i32
    %96 = arith.sitofp %c0_i32_29 : i32 to bf16
    %97 = vector.shape_cast %95 : vector<1x256xi1> to vector<1x256xi1>
    %98 = vector.broadcast %97 : vector<1x256xi1> to vector<16x256xi1>
    %99 = vector.broadcast %96 : bf16 to vector<16x256xbf16>
    %100 = arith.select %98, %86, %99 : vector<16x256xi1>, vector<16x256xbf16>
    %101 = vector.extract_strided_slice %23 {offsets = [0, 144], sizes = [16, 256], strides = [1, 1]} : vector<16x512xbf16> to vector<16x256xbf16>
    %102 = vector.extract_strided_slice %23 {offsets = [0, 145], sizes = [16, 256], strides = [1, 1]} : vector<16x512xbf16> to vector<16x256xbf16>
    %c1_i32_30 = arith.constant 1 : i32
    %103 = vector.broadcast %c1_i32_30 : i32 to vector<1x256xi32>
    %104 = arith.addi %18, %103 : vector<1x256xi32>
    %c0_i32_31 = arith.constant 0 : i32
    %105 = vector.broadcast %c0_i32_31 : i32 to vector<1x256xi32>
    %106 = arith.cmpi sge, %104, %105 : vector<1x256xi32>
    %c1_i32_32 = arith.constant 1 : i32
    %107 = vector.broadcast %c1_i32_32 : i32 to vector<1x256xi32>
    %108 = arith.addi %18, %107 : vector<1x256xi32>
    %c16_i32_33 = arith.constant 16 : i32
    %109 = vector.broadcast %c16_i32_33 : i32 to vector<1x256xi32>
    %110 = arith.cmpi slt, %108, %109 : vector<1x256xi32>
    %111 = arith.andi %106, %110 : vector<1x256xi1>
    %c0_i32_34 = arith.constant 0 : i32
    %112 = arith.sitofp %c0_i32_34 : i32 to bf16
    %113 = vector.shape_cast %111 : vector<1x256xi1> to vector<1x256xi1>
    %114 = vector.broadcast %113 : vector<1x256xi1> to vector<16x256xi1>
    %115 = vector.broadcast %112 : bf16 to vector<16x256xbf16>
    %116 = arith.select %114, %102, %115 : vector<16x256xi1>, vector<16x256xbf16>
    %117 = tpu.concatenate %38, %39, %54, %69, %70, %85, %100, %101, %116 in 0 : vector<16x256xbf16>, vector<16x256xbf16>, vector<16x256xbf16>, vector<16x256xbf16>, vector<16x256xbf16>, vector<16x256xbf16>, vector<16x256xbf16>, vector<16x256xbf16>, vector<16x256xbf16> -> vector<144x256xbf16>
    %c0_35 = arith.constant 0 : index
    %c0_36 = arith.constant 0 : index
    %118 = vector.load %arg2[%c0_35, %c0_36] : memref<8x144xbf16, #tpu.memory_space<vmem>>, vector<8x144xbf16>
    %cst_37 = arith.constant dense<0.000000e+00> : vector<8x256xf32>
    %119 = tpu.matmul %118, %117, %cst_37 {dimension_numbers = #tpu.dot_dimension_numbers<[1], [0], [0], [1], [0, 0, 1, 1], [], []>} : vector<8x144xbf16>, vector<144x256xbf16>, vector<8x256xf32> -> vector<8x256xf32>
    %c0_38 = arith.constant 0 : index
    %c0_39 = arith.constant 0 : index
    %120 = vector.load %arg3[%c0_38, %c0_39] : memref<8x1xf32, #tpu.memory_space<vmem>>, vector<8x1xf32>
    %121 = vector.broadcast %120 : vector<8x1xf32> to vector<8x256xf32>
    %122 = arith.mulf %119, %121 : vector<8x256xf32>
    %c0_40 = arith.constant 0 : index
    %c0_41 = arith.constant 0 : index
    %123 = vector.load %arg4[%c0_40, %c0_41] : memref<8x1xf32, #tpu.memory_space<vmem>>, vector<8x1xf32>
    %124 = vector.broadcast %123 : vector<8x1xf32> to vector<8x256xf32>
    %125 = arith.addf %122, %124 : vector<8x256xf32>
    %cst_42 = arith.constant 0.000000e+00 : f32
    %126 = vector.broadcast %cst_42 : f32 to vector<8x256xf32>
    %127 = arith.maximumf %125, %126 : vector<8x256xf32>
    %cst_43 = arith.constant 0.000000e+00 : f32
    %128 = vector.broadcast %cst_43 : f32 to vector<8x256xf32>
    %129 = tpu.concatenate %127, %128 in 0 : vector<8x256xf32>, vector<8x256xf32> -> vector<16x256xf32>
    %130 = arith.truncf %129 : vector<16x256xf32> to vector<16x256xbf16>
    %cst_44 = arith.constant 0.000000e+00 : bf16
    %131 = vector.broadcast %cst_44 : bf16 to vector<16x128xbf16>
    %132 = tpu.concatenate %131, %130, %131 in 1 : vector<16x128xbf16>, vector<16x256xbf16>, vector<16x128xbf16> -> vector<16x512xbf16>
    %133 = vector.extract_strided_slice %132 {offsets = [0, 111], sizes = [16, 256], strides = [1, 1]} : vector<16x512xbf16> to vector<16x256xbf16>
    %c-1_i32_45 = arith.constant -1 : i32
    %134 = vector.broadcast %c-1_i32_45 : i32 to vector<1x256xi32>
    %135 = arith.addi %18, %134 : vector<1x256xi32>
    %c0_i32_46 = arith.constant 0 : i32
    %136 = vector.broadcast %c0_i32_46 : i32 to vector<1x256xi32>
    %137 = arith.cmpi sge, %135, %136 : vector<1x256xi32>
    %c-1_i32_47 = arith.constant -1 : i32
    %138 = vector.broadcast %c-1_i32_47 : i32 to vector<1x256xi32>
    %139 = arith.addi %18, %138 : vector<1x256xi32>
    %c16_i32_48 = arith.constant 16 : i32
    %140 = vector.broadcast %c16_i32_48 : i32 to vector<1x256xi32>
    %141 = arith.cmpi slt, %139, %140 : vector<1x256xi32>
    %142 = arith.andi %137, %141 : vector<1x256xi1>
    %c0_i32_49 = arith.constant 0 : i32
    %143 = arith.sitofp %c0_i32_49 : i32 to bf16
    %144 = vector.shape_cast %142 : vector<1x256xi1> to vector<1x256xi1>
    %145 = vector.broadcast %144 : vector<1x256xi1> to vector<16x256xi1>
    %146 = vector.broadcast %143 : bf16 to vector<16x256xbf16>
    %147 = arith.select %145, %133, %146 : vector<16x256xi1>, vector<16x256xbf16>
    %148 = vector.extract_strided_slice %132 {offsets = [0, 112], sizes = [16, 256], strides = [1, 1]} : vector<16x512xbf16> to vector<16x256xbf16>
    %149 = vector.extract_strided_slice %132 {offsets = [0, 113], sizes = [16, 256], strides = [1, 1]} : vector<16x512xbf16> to vector<16x256xbf16>
    %c1_i32_50 = arith.constant 1 : i32
    %150 = vector.broadcast %c1_i32_50 : i32 to vector<1x256xi32>
    %151 = arith.addi %18, %150 : vector<1x256xi32>
    %c0_i32_51 = arith.constant 0 : i32
    %152 = vector.broadcast %c0_i32_51 : i32 to vector<1x256xi32>
    %153 = arith.cmpi sge, %151, %152 : vector<1x256xi32>
    %c1_i32_52 = arith.constant 1 : i32
    %154 = vector.broadcast %c1_i32_52 : i32 to vector<1x256xi32>
    %155 = arith.addi %18, %154 : vector<1x256xi32>
    %c16_i32_53 = arith.constant 16 : i32
    %156 = vector.broadcast %c16_i32_53 : i32 to vector<1x256xi32>
    %157 = arith.cmpi slt, %155, %156 : vector<1x256xi32>
    %158 = arith.andi %153, %157 : vector<1x256xi1>
    %c0_i32_54 = arith.constant 0 : i32
    %159 = arith.sitofp %c0_i32_54 : i32 to bf16
    %160 = vector.shape_cast %158 : vector<1x256xi1> to vector<1x256xi1>
    %161 = vector.broadcast %160 : vector<1x256xi1> to vector<16x256xi1>
    %162 = vector.broadcast %159 : bf16 to vector<16x256xbf16>
    %163 = arith.select %161, %149, %162 : vector<16x256xi1>, vector<16x256xbf16>
    %164 = vector.extract_strided_slice %132 {offsets = [0, 127], sizes = [16, 256], strides = [1, 1]} : vector<16x512xbf16> to vector<16x256xbf16>
    %c-1_i32_55 = arith.constant -1 : i32
    %165 = vector.broadcast %c-1_i32_55 : i32 to vector<1x256xi32>
    %166 = arith.addi %18, %165 : vector<1x256xi32>
    %c0_i32_56 = arith.constant 0 : i32
    %167 = vector.broadcast %c0_i32_56 : i32 to vector<1x256xi32>
    %168 = arith.cmpi sge, %166, %167 : vector<1x256xi32>
    %c-1_i32_57 = arith.constant -1 : i32
    %169 = vector.broadcast %c-1_i32_57 : i32 to vector<1x256xi32>
    %170 = arith.addi %18, %169 : vector<1x256xi32>
    %c16_i32_58 = arith.constant 16 : i32
    %171 = vector.broadcast %c16_i32_58 : i32 to vector<1x256xi32>
    %172 = arith.cmpi slt, %170, %171 : vector<1x256xi32>
    %173 = arith.andi %168, %172 : vector<1x256xi1>
    %c0_i32_59 = arith.constant 0 : i32
    %174 = arith.sitofp %c0_i32_59 : i32 to bf16
    %175 = vector.shape_cast %173 : vector<1x256xi1> to vector<1x256xi1>
    %176 = vector.broadcast %175 : vector<1x256xi1> to vector<16x256xi1>
    %177 = vector.broadcast %174 : bf16 to vector<16x256xbf16>
    %178 = arith.select %176, %164, %177 : vector<16x256xi1>, vector<16x256xbf16>
    %179 = vector.extract_strided_slice %132 {offsets = [0, 128], sizes = [16, 256], strides = [1, 1]} : vector<16x512xbf16> to vector<16x256xbf16>
    %180 = vector.extract_strided_slice %132 {offsets = [0, 129], sizes = [16, 256], strides = [1, 1]} : vector<16x512xbf16> to vector<16x256xbf16>
    %c1_i32_60 = arith.constant 1 : i32
    %181 = vector.broadcast %c1_i32_60 : i32 to vector<1x256xi32>
    %182 = arith.addi %18, %181 : vector<1x256xi32>
    %c0_i32_61 = arith.constant 0 : i32
    %183 = vector.broadcast %c0_i32_61 : i32 to vector<1x256xi32>
    %184 = arith.cmpi sge, %182, %183 : vector<1x256xi32>
    %c1_i32_62 = arith.constant 1 : i32
    %185 = vector.broadcast %c1_i32_62 : i32 to vector<1x256xi32>
    %186 = arith.addi %18, %185 : vector<1x256xi32>
    %c16_i32_63 = arith.constant 16 : i32
    %187 = vector.broadcast %c16_i32_63 : i32 to vector<1x256xi32>
    %188 = arith.cmpi slt, %186, %187 : vector<1x256xi32>
    %189 = arith.andi %184, %188 : vector<1x256xi1>
    %c0_i32_64 = arith.constant 0 : i32
    %190 = arith.sitofp %c0_i32_64 : i32 to bf16
    %191 = vector.shape_cast %189 : vector<1x256xi1> to vector<1x256xi1>
    %192 = vector.broadcast %191 : vector<1x256xi1> to vector<16x256xi1>
    %193 = vector.broadcast %190 : bf16 to vector<16x256xbf16>
    %194 = arith.select %192, %180, %193 : vector<16x256xi1>, vector<16x256xbf16>
    %195 = vector.extract_strided_slice %132 {offsets = [0, 143], sizes = [16, 256], strides = [1, 1]} : vector<16x512xbf16> to vector<16x256xbf16>
    %c-1_i32_65 = arith.constant -1 : i32
    %196 = vector.broadcast %c-1_i32_65 : i32 to vector<1x256xi32>
    %197 = arith.addi %18, %196 : vector<1x256xi32>
    %c0_i32_66 = arith.constant 0 : i32
    %198 = vector.broadcast %c0_i32_66 : i32 to vector<1x256xi32>
    %199 = arith.cmpi sge, %197, %198 : vector<1x256xi32>
    %c-1_i32_67 = arith.constant -1 : i32
    %200 = vector.broadcast %c-1_i32_67 : i32 to vector<1x256xi32>
    %201 = arith.addi %18, %200 : vector<1x256xi32>
    %c16_i32_68 = arith.constant 16 : i32
    %202 = vector.broadcast %c16_i32_68 : i32 to vector<1x256xi32>
    %203 = arith.cmpi slt, %201, %202 : vector<1x256xi32>
    %204 = arith.andi %199, %203 : vector<1x256xi1>
    %c0_i32_69 = arith.constant 0 : i32
    %205 = arith.sitofp %c0_i32_69 : i32 to bf16
    %206 = vector.shape_cast %204 : vector<1x256xi1> to vector<1x256xi1>
    %207 = vector.broadcast %206 : vector<1x256xi1> to vector<16x256xi1>
    %208 = vector.broadcast %205 : bf16 to vector<16x256xbf16>
    %209 = arith.select %207, %195, %208 : vector<16x256xi1>, vector<16x256xbf16>
    %210 = vector.extract_strided_slice %132 {offsets = [0, 144], sizes = [16, 256], strides = [1, 1]} : vector<16x512xbf16> to vector<16x256xbf16>
    %211 = vector.extract_strided_slice %132 {offsets = [0, 145], sizes = [16, 256], strides = [1, 1]} : vector<16x512xbf16> to vector<16x256xbf16>
    %c1_i32_70 = arith.constant 1 : i32
    %212 = vector.broadcast %c1_i32_70 : i32 to vector<1x256xi32>
    %213 = arith.addi %18, %212 : vector<1x256xi32>
    %c0_i32_71 = arith.constant 0 : i32
    %214 = vector.broadcast %c0_i32_71 : i32 to vector<1x256xi32>
    %215 = arith.cmpi sge, %213, %214 : vector<1x256xi32>
    %c1_i32_72 = arith.constant 1 : i32
    %216 = vector.broadcast %c1_i32_72 : i32 to vector<1x256xi32>
    %217 = arith.addi %18, %216 : vector<1x256xi32>
    %c16_i32_73 = arith.constant 16 : i32
    %218 = vector.broadcast %c16_i32_73 : i32 to vector<1x256xi32>
    %219 = arith.cmpi slt, %217, %218 : vector<1x256xi32>
    %220 = arith.andi %215, %219 : vector<1x256xi1>
    %c0_i32_74 = arith.constant 0 : i32
    %221 = arith.sitofp %c0_i32_74 : i32 to bf16
    %222 = vector.shape_cast %220 : vector<1x256xi1> to vector<1x256xi1>
    %223 = vector.broadcast %222 : vector<1x256xi1> to vector<16x256xi1>
    %224 = vector.broadcast %221 : bf16 to vector<16x256xbf16>
    %225 = arith.select %223, %211, %224 : vector<16x256xi1>, vector<16x256xbf16>
    %226 = tpu.concatenate %147, %148, %163, %178, %179, %194, %209, %210, %225 in 0 : vector<16x256xbf16>, vector<16x256xbf16>, vector<16x256xbf16>, vector<16x256xbf16>, vector<16x256xbf16>, vector<16x256xbf16>, vector<16x256xbf16>, vector<16x256xbf16>, vector<16x256xbf16> -> vector<144x256xbf16>
    %c0_75 = arith.constant 0 : index
    %c0_76 = arith.constant 0 : index
    %227 = vector.load %arg5[%c0_75, %c0_76] : memref<8x144xbf16, #tpu.memory_space<vmem>>, vector<8x144xbf16>
    %cst_77 = arith.constant dense<0.000000e+00> : vector<8x256xf32>
    %228 = tpu.matmul %227, %226, %cst_77 {dimension_numbers = #tpu.dot_dimension_numbers<[1], [0], [0], [1], [0, 0, 1, 1], [], []>} : vector<8x144xbf16>, vector<144x256xbf16>, vector<8x256xf32> -> vector<8x256xf32>
    %c0_78 = arith.constant 0 : index
    %c0_79 = arith.constant 0 : index
    %229 = vector.load %arg6[%c0_78, %c0_79] : memref<8x1xf32, #tpu.memory_space<vmem>>, vector<8x1xf32>
    %230 = vector.broadcast %229 : vector<8x1xf32> to vector<8x256xf32>
    %231 = arith.mulf %228, %230 : vector<8x256xf32>
    %c0_80 = arith.constant 0 : index
    %c0_81 = arith.constant 0 : index
    %232 = vector.load %arg7[%c0_80, %c0_81] : memref<8x1xf32, #tpu.memory_space<vmem>>, vector<8x1xf32>
    %233 = vector.broadcast %232 : vector<8x1xf32> to vector<8x256xf32>
    %234 = arith.addf %231, %233 : vector<8x256xf32>
    %c0_82 = arith.constant 0 : index
    %c0_83 = arith.constant 0 : index
    %235 = vector.load %arg8[%c0_82, %c0_83] : memref<10x8xbf16, #tpu.memory_space<vmem>>, vector<10x8xbf16>
    %236 = arith.truncf %234 : vector<8x256xf32> to vector<8x256xbf16>
    %cst_84 = arith.constant dense<0.000000e+00> : vector<10x256xf32>
    %237 = tpu.matmul %235, %236, %cst_84 {dimension_numbers = #tpu.dot_dimension_numbers<[1], [0], [0], [1], [0, 0, 1, 1], [], []>} : vector<10x8xbf16>, vector<8x256xbf16>, vector<10x256xf32> -> vector<10x256xf32>
    %c0_85 = arith.constant 0 : index
    %c0_86 = arith.constant 0 : index
    %238 = vector.load %arg9[%c0_85, %c0_86] : memref<10x1xf32, #tpu.memory_space<vmem>>, vector<10x1xf32>
    %239 = vector.broadcast %238 : vector<10x1xf32> to vector<10x256xf32>
    %240 = arith.addf %237, %239 : vector<10x256xf32>
    %241 = vector.extract_strided_slice %240 {offsets = [0, 0], sizes = [8, 256], strides = [1, 1]} : vector<10x256xf32> to vector<8x256xf32>
    %242 = vector.extract_strided_slice %240 {offsets = [8, 0], sizes = [1, 256], strides = [1, 1]} : vector<10x256xf32> to vector<1x256xf32>
    %243 = vector.extract_strided_slice %240 {offsets = [9, 0], sizes = [1, 256], strides = [1, 1]} : vector<10x256xf32> to vector<1x256xf32>
    %244 = arith.truncf %243 : vector<1x256xf32> to vector<1x256xbf16>
    %245 = arith.truncf %242 : vector<1x256xf32> to vector<1x256xbf16>
    %cst_87 = arith.constant dense<0.000000e+00> : vector<256x256xf32>
    %246 = tpu.matmul %244, %245, %cst_87 {dimension_numbers = #tpu.dot_dimension_numbers<[0], [0], [1], [1], [0, 1, 1, 1], [], []>} : vector<1x256xbf16>, vector<1x256xbf16>, vector<256x256xf32> -> vector<256x256xf32>
    %cst_88 = arith.constant dense<0xFF800000> : vector<256xf32>
    %247 = vector.multi_reduction <maximumf>, %246, %cst_88 [0] : vector<256x256xf32> to vector<256xf32>
    %248 = vector.shape_cast %247 : vector<256xf32> to vector<1x256xf32>
    %249 = vector.broadcast %248 : vector<1x256xf32> to vector<256x256xf32>
    %250 = arith.subf %246, %249 : vector<256x256xf32>
    %251 = math.exp %250 : vector<256x256xf32>
    %cst_89 = arith.constant dense<0.000000e+00> : vector<256xf32>
    %252 = vector.multi_reduction <add>, %251, %cst_89 [0] : vector<256x256xf32> to vector<256xf32>
    %253 = vector.shape_cast %252 : vector<256xf32> to vector<1x256xf32>
    %254 = arith.truncf %241 : vector<8x256xf32> to vector<8x256xbf16>
    %255 = arith.truncf %251 : vector<256x256xf32> to vector<256x256xbf16>
    %cst_90 = arith.constant dense<0.000000e+00> : vector<8x256xf32>
    %256 = tpu.matmul %254, %255, %cst_90 {dimension_numbers = #tpu.dot_dimension_numbers<[1], [0], [0], [1], [0, 0, 1, 1], [], []>} : vector<8x256xbf16>, vector<256x256xbf16>, vector<8x256xf32> -> vector<8x256xf32>
    %257 = tpu.reciprocal %253 {approx = true} : vector<1x256xf32> -> vector<1x256xf32>
    %258 = vector.broadcast %257 : vector<1x256xf32> to vector<8x256xf32>
    %259 = arith.mulf %256, %258 : vector<8x256xf32>
    %c0_91 = arith.constant 0 : index
    %260 = memref.load %arg10[%c0_91] : memref<1xf32, #tpu.memory_space<smem>>
    %261 = vector.broadcast %260 : f32 to vector<8x256xf32>
    %262 = arith.mulf %261, %259 : vector<8x256xf32>
    %263 = arith.addf %262, %234 : vector<8x256xf32>
    %264 = arith.addf %263, %1 : vector<8x256xf32>
    %cst_92 = arith.constant 0.000000e+00 : f32
    %265 = vector.broadcast %cst_92 : f32 to vector<8x256xf32>
    %266 = arith.maximumf %264, %265 : vector<8x256xf32>
    %c0_93 = arith.constant 0 : index
    %c0_94 = arith.constant 0 : index
    %c0_95 = arith.constant 0 : index
    %267 = vector.load %arg11[%c0_93, %c0_94, %c0_95] : memref<1x8x256xf32, #tpu.memory_space<vmem>>, vector<1x8x256xf32>
    %268 = vector.shape_cast %267 : vector<1x8x256xf32> to vector<8x256xf32>
    %269 = vector.shape_cast %266 : vector<8x256xf32> to vector<1x8x256xf32>
    tpu.vector_store %arg11[%c0_93, %c0_94, %c0_95], %269 {strides = array<i32>} : memref<1x8x256xf32, #tpu.memory_space<vmem>>, vector<1x8x256xf32>,
    return
  }
  func.func @transform_0(%arg0: i32) -> (i32, i32, i32) {
    %c0_i32 = arith.constant 0 : i32
    %c0_i32_0 = arith.constant 0 : i32
    %c0_i32_1 = arith.constant 0 : i32
    return %arg0, %c0_i32, %c0_i32_0 : i32, i32, i32
  }
  func.func @transform_1(%arg0: i32) -> (i32, i32) {
    %c0_i32 = arith.constant 0 : i32
    %c0_i32_0 = arith.constant 0 : i32
    %c0_i32_1 = arith.constant 0 : i32
    return %c0_i32, %c0_i32_0 : i32, i32
  }
  func.func @transform_2(%arg0: i32) -> (i32, i32) {
    %c0_i32 = arith.constant 0 : i32
    %c0_i32_0 = arith.constant 0 : i32
    %c0_i32_1 = arith.constant 0 : i32
    return %c0_i32, %c0_i32_0 : i32, i32
  }
  func.func @transform_3(%arg0: i32) -> (i32, i32) {
    %c0_i32 = arith.constant 0 : i32
    %c0_i32_0 = arith.constant 0 : i32
    %c0_i32_1 = arith.constant 0 : i32
    return %c0_i32, %c0_i32_0 : i32, i32
  }
  func.func @transform_4(%arg0: i32) -> (i32, i32) {
    %c0_i32 = arith.constant 0 : i32
    %c0_i32_0 = arith.constant 0 : i32
    %c0_i32_1 = arith.constant 0 : i32
    return %c0_i32, %c0_i32_0 : i32, i32
  }
  func.func @transform_5(%arg0: i32) -> (i32, i32) {
    %c0_i32 = arith.constant 0 : i32
    %c0_i32_0 = arith.constant 0 : i32
    %c0_i32_1 = arith.constant 0 : i32
    return %c0_i32, %c0_i32_0 : i32, i32
  }
  func.func @transform_6(%arg0: i32) -> (i32, i32) {
    %c0_i32 = arith.constant 0 : i32
    %c0_i32_0 = arith.constant 0 : i32
    %c0_i32_1 = arith.constant 0 : i32
    return %c0_i32, %c0_i32_0 : i32, i32
  }
  func.func @transform_7(%arg0: i32) -> (i32, i32) {
    %c0_i32 = arith.constant 0 : i32
    %c0_i32_0 = arith.constant 0 : i32
    %c0_i32_1 = arith.constant 0 : i32
    return %c0_i32, %c0_i32_0 : i32, i32
  }
  func.func @transform_8(%arg0: i32) -> (i32, i32) {
    %c0_i32 = arith.constant 0 : i32
    %c0_i32_0 = arith.constant 0 : i32
    %c0_i32_1 = arith.constant 0 : i32
    return %c0_i32, %c0_i32_0 : i32, i32
  }
  func.func @transform_9(%arg0: i32) -> i32 {
    %c0_i32 = arith.constant 0 : i32
    %c0_i32_0 = arith.constant 0 : i32
    return %c0_i32 : i32
  }
  func.func @transform_10(%arg0: i32) -> (i32, i32, i32) {
    %c0_i32 = arith.constant 0 : i32
    %c0_i32_0 = arith.constant 0 : i32
    %c0_i32_1 = arith.constant 0 : i32
    return %arg0, %c0_i32, %c0_i32_0 : i32, i32, i32
  }
}

</mosaic_0001>

<llo_original>
// kernel: residual_block_forward.1
$region0: #{residual_block_forward.1}
  #allocation0 [shape = 'u32[]', space=smem, size = 0x4, offset = 0x4, fixed_abs, tag = 'smem constant byte address 0x4 - core index']
  #allocation1 [shape = 'u32[72,128]{1,0:T(1,128)}', space=vmem, size = 0x9000, scoped, tag = 'internal scratch']
  #allocation2 [shape = 'f32[1]{0:T(128)S(6)}', space=smem, size = 0x200, scoped, tag = 'scoped memory for residual_block_forward.1']
  %s0 = inlined_call_operand.vmem [shape: f32[2,8,256], index: 0, kind: input, shape index: {}]
  %s1 = inlined_call_operand.vmem [shape: bf16[8,144], index: 1, kind: input, shape index: {}]
  %s2 = inlined_call_operand.vmem [shape: f32[8,1], index: 2, kind: input, shape index: {}]
  %s3 = inlined_call_operand.vmem [shape: f32[8,1], index: 3, kind: input, shape index: {}]
  %s4 = inlined_call_operand.vmem [shape: bf16[8,144], index: 4, kind: input, shape index: {}]
  %s5 = inlined_call_operand.vmem [shape: f32[8,1], index: 5, kind: input, shape index: {}]
  %s6 = inlined_call_operand.vmem [shape: f32[8,1], index: 6, kind: input, shape index: {}]
  %s7 = inlined_call_operand.vmem [shape: bf16[10,8], index: 7, kind: input, shape index: {}]
  %s8 = inlined_call_operand.vmem [shape: f32[10,1], index: 8, kind: input, shape index: {}]
  %s9 = inlined_call_operand.<no memory space> [shape: f32[1], index: 9, kind: input, shape index: {}]
  %s10 = inlined_call_operand.vmem [shape: f32[2,8,256], index: 10, kind: output, shape index: {}]
  %s11 = sld [smem:[#allocation0]]
  $region73: #{residual_block_forward.1} parent=0
    _
  %s13 = ssub.s32 1, %s11
  %s14 = scalar_select 0, %s13, %s11
  %15 = sst [smem:[#allocation2]] %s9
  loop: start=0, step=1, limit=4
  $region2: #{residual_block_forward.1} parent=0 // loop_pre_header
    _
  $region3: #{residual_block_forward.1} parent=0 // loop_header
    %s17 = sphi 0, %s21
    %p18 = scmp.ge.s32.totalorder %s17, 4
    %s27 = sphi 0, %s29
    %s30 = sphi 0, %s27
    %s31 = sphi 0, %s30
    %s47 = sphi 0, %s31
    %s51 = sphi 0, %s51
    %s53 = sphi 0, %s51
    %s54 = sphi 0, %s53
    %s68 = sphi 0, %s54
    %s72 = sphi 0, %s72
    %s74 = sphi 0, %s72
    %s75 = sphi 0, %s74
    %s89 = sphi 0, %s75
    %s93 = sphi 0, %s93
    %s95 = sphi 0, %s93
    %s96 = sphi 0, %s95
    %s110 = sphi 0, %s96
    %s114 = sphi 0, %s114
    %s116 = sphi 0, %s114
    %s117 = sphi 0, %s116
    %s131 = sphi 0, %s117
    %s135 = sphi 0, %s135
    %s137 = sphi 0, %s135
    %s138 = sphi 0, %s137
    %s152 = sphi 0, %s138
    %s156 = sphi 0, %s156
    %s158 = sphi 0, %s156
    %s159 = sphi 0, %s158
    %s173 = sphi 0, %s159
    %s177 = sphi 0, %s177
    %s179 = sphi 0, %s177
    %s180 = sphi 0, %s179
    %s194 = sphi 0, %s180
    %s198 = sphi 0, %s198
    %s200 = sphi 0, %s198
    %s201 = sphi 0, %s200
    %s215 = sphi 0, %s201
    %s219 = sphi 0, %s219
    %s221 = sphi 0, %s219
    %s222 = sphi 0, %s221
    %s236 = sphi 0, %s222
    %s242 = sphi 0, %s244
    %s245 = sphi 0, %s242
    %s246 = sphi 0, %s245
    %s262 = sphi 0, %s246
  $region4: #{residual_block_forward.1} parent=0 // loop_header_branch
    %20 = sbr.rel (%p18) target = $region8
  $region5: #{residual_block_forward.1} parent=0 // loop_body
    %s22 = ssub.s32 %s17, 1
    %s23 = ssub.s32 %s17, 2
    %s24 = sadd.s32 %s17, 1
    %s25 = ssub.s32 %s17, %s24
    %p26 = scmp.eq.s32.totalorder %s25, 0
    %s28 = sadd.s32 %s27, 1
    %s29 = scalar_select %p26, %s27, %s28
    %p32 = pneg %p26
    %p33 = scmp.eq.s32.totalorder %s17, 1
    %p34 = por %p32, %p33
    %p35 = scmp.ne.s32.totalorder %s27, %s30
    %p36 = scmp.eq.s32.totalorder %s17, 0
    %p37 = por %p35, %p36
    %p38 = scmp.ne.s32.totalorder %s27, %s30
    %p39 = scmp.eq.s32.totalorder %s22, 1
    %p40 = por %p38, %p39
    %p41 = scmp.ne.s32.totalorder %s30, %s31
    %p42 = scmp.eq.s32.totalorder %s22, 0
    %p43 = por %p41, %p42
    %p44 = scmp.ne.s32.totalorder %s30, %s31
    %p45 = scmp.eq.s32.totalorder %s23, 1
    %p46 = por %p44, %p45
    %p48 = scmp.ne.s32.totalorder %s31, %s47
    %p49 = scmp.eq.s32.totalorder %s23, 0
    %p50 = por %p48, %p49
    %s52 = sadd.s32 %s51, 1
    %p55 = scmp.eq.s32.totalorder %s17, 1
    %p56 = scmp.ne.s32.totalorder %s51, %s53
    %p57 = scmp.eq.s32.totalorder %s17, 0
    %p58 = por %p56, %p57
    %p59 = scmp.ne.s32.totalorder %s51, %s53
    %p60 = scmp.eq.s32.totalorder %s22, 1
    %p61 = por %p59, %p60
    %p62 = scmp.ne.s32.totalorder %s53, %s54
    %p63 = scmp.eq.s32.totalorder %s22, 0
    %p64 = por %p62, %p63
    %p65 = scmp.ne.s32.totalorder %s53, %s54
    %p66 = scmp.eq.s32.totalorder %s23, 1
    %p67 = por %p65, %p66
    %p69 = scmp.ne.s32.totalorder %s54, %s68
    %p70 = scmp.eq.s32.totalorder %s23, 0
    %p71 = por %p69, %p70
    %s73 = sadd.s32 %s72, 1
    %p76 = scmp.eq.s32.totalorder %s17, 1
    %p77 = scmp.ne.s32.totalorder %s72, %s74
    %p78 = scmp.eq.s32.totalorder %s17, 0
    %p79 = por %p77, %p78
    %p80 = scmp.ne.s32.totalorder %s72, %s74
    %p81 = scmp.eq.s32.totalorder %s22, 1
    %p82 = por %p80, %p81
    %p83 = scmp.ne.s32.totalorder %s74, %s75
    %p84 = scmp.eq.s32.totalorder %s22, 0
    %p85 = por %p83, %p84
    %p86 = scmp.ne.s32.totalorder %s74, %s75
    %p87 = scmp.eq.s32.totalorder %s23, 1
    %p88 = por %p86, %p87
    %p90 = scmp.ne.s32.totalorder %s75, %s89
    %p91 = scmp.eq.s32.totalorder %s23, 0
    %p92 = por %p90, %p91
    %s94 = sadd.s32 %s93, 1
    %p97 = scmp.eq.s32.totalorder %s17, 1
    %p98 = scmp.ne.s32.totalorder %s93, %s95
    %p99 = scmp.eq.s32.totalorder %s17, 0
    %p100 = por %p98, %p99
    %p101 = scmp.ne.s32.totalorder %s93, %s95
    %p102 = scmp.eq.s32.totalorder %s22, 1
    %p103 = por %p101, %p102
    %p104 = scmp.ne.s32.totalorder %s95, %s96
    %p105 = scmp.eq.s32.totalorder %s22, 0
    %p106 = por %p104, %p105
    %p107 = scmp.ne.s32.totalorder %s95, %s96
    %p108 = scmp.eq.s32.totalorder %s23, 1
    %p109 = por %p107, %p108
    %p111 = scmp.ne.s32.totalorder %s96, %s110
    %p112 = scmp.eq.s32.totalorder %s23, 0
    %p113 = por %p111, %p112
    %s115 = sadd.s32 %s114, 1
    %p118 = scmp.eq.s32.totalorder %s17, 1
    %p119 = scmp.ne.s32.totalorder %s114, %s116
    %p120 = scmp.eq.s32.totalorder %s17, 0
    %p121 = por %p119, %p120
    %p122 = scmp.ne.s32.totalorder %s114, %s116
    %p123 = scmp.eq.s32.totalorder %s22, 1
    %p124 = por %p122, %p123
    %p125 = scmp.ne.s32.totalorder %s116, %s117
    %p126 = scmp.eq.s32.totalorder %s22, 0
    %p127 = por %p125, %p126
    %p128 = scmp.ne.s32.totalorder %s116, %s117
    %p129 = scmp.eq.s32.totalorder %s23, 1
    %p130 = por %p128, %p129
    %p132 = scmp.ne.s32.totalorder %s117, %s131
    %p133 = scmp.eq.s32.totalorder %s23, 0
    %p134 = por %p132, %p133
    %s136 = sadd.s32 %s135, 1
    %p139 = scmp.eq.s32.totalorder %s17, 1
    %p140 = scmp.ne.s32.totalorder %s135, %s137
    %p141 = scmp.eq.s32.totalorder %s17, 0
    %p142 = por %p140, %p141
    %p143 = scmp.ne.s32.totalorder %s135, %s137
    %p144 = scmp.eq.s32.totalorder %s22, 1
    %p145 = por %p143, %p144
    %p146 = scmp.ne.s32.totalorder %s137, %s138
    %p147 = scmp.eq.s32.totalorder %s22, 0
    %p148 = por %p146, %p147
    %p149 = scmp.ne.s32.totalorder %s137, %s138
    %p150 = scmp.eq.s32.totalorder %s23, 1
    %p151 = por %p149, %p150
    %p153 = scmp.ne.s32.totalorder %s138, %s152
    %p154 = scmp.eq.s32.totalorder %s23, 0
    %p155 = por %p153, %p154
    %s157 = sadd.s32 %s156, 1
    %p160 = scmp.eq.s32.totalorder %s17, 1
    %p161 = scmp.ne.s32.totalorder %s156, %s158
    %p162 = scmp.eq.s32.totalorder %s17, 0
    %p163 = por %p161, %p162
    %p164 = scmp.ne.s32.totalorder %s156, %s158
    %p165 = scmp.eq.s32.totalorder %s22, 1
    %p166 = por %p164, %p165
    %p167 = scmp.ne.s32.totalorder %s158, %s159
    %p168 = scmp.eq.s32.totalorder %s22, 0
    %p169 = por %p167, %p168
    %p170 = scmp.ne.s32.totalorder %s158, %s159
    %p171 = scmp.eq.s32.totalorder %s23, 1
    %p172 = por %p170, %p171
    %p174 = scmp.ne.s32.totalorder %s159, %s173
    %p175 = scmp.eq.s32.totalorder %s23, 0
    %p176 = por %p174, %p175
    %s178 = sadd.s32 %s177, 1
    %p181 = scmp.eq.s32.totalorder %s17, 1
    %p182 = scmp.ne.s32.totalorder %s177, %s179
    %p183 = scmp.eq.s32.totalorder %s17, 0
    %p184 = por %p182, %p183
    %p185 = scmp.ne.s32.totalorder %s177, %s179
    %p186 = scmp.eq.s32.totalorder %s22, 1
    %p187 = por %p185, %p186
    %p188 = scmp.ne.s32.totalorder %s179, %s180
    %p189 = scmp.eq.s32.totalorder %s22, 0
    %p190 = por %p188, %p189
    %p191 = scmp.ne.s32.totalorder %s179, %s180
    %p192 = scmp.eq.s32.totalorder %s23, 1
    %p193 = por %p191, %p192
    %p195 = scmp.ne.s32.totalorder %s180, %s194
    %p196 = scmp.eq.s32.totalorder %s23, 0
    %p197 = por %p195, %p196
    %s199 = sadd.s32 %s198, 1
    %p202 = scmp.eq.s32.totalorder %s17, 1
    %p203 = scmp.ne.s32.totalorder %s198, %s200
    %p204 = scmp.eq.s32.totalorder %s17, 0
    %p205 = por %p203, %p204
    %p206 = scmp.ne.s32.totalorder %s198, %s200
    %p207 = scmp.eq.s32.totalorder %s22, 1
    %p208 = por %p206, %p207
    %p209 = scmp.ne.s32.totalorder %s200, %s201
    %p210 = scmp.eq.s32.totalorder %s22, 0
    %p211 = por %p209, %p210
    %p212 = scmp.ne.s32.totalorder %s200, %s201
    %p213 = scmp.eq.s32.totalorder %s23, 1
    %p214 = por %p212, %p213
    %p216 = scmp.ne.s32.totalorder %s201, %s215
    %p217 = scmp.eq.s32.totalorder %s23, 0
    %p218 = por %p216, %p217
    %s220 = sadd.s32 %s219, 1
    %p223 = scmp.eq.s32.totalorder %s17, 1
    %p224 = scmp.ne.s32.totalorder %s219, %s221
    %p225 = scmp.eq.s32.totalorder %s17, 0
    %p226 = por %p224, %p225
    %p227 = scmp.ne.s32.totalorder %s219, %s221
    %p228 = scmp.eq.s32.totalorder %s22, 1
    %p229 = por %p227, %p228
    %p230 = scmp.ne.s32.totalorder %s221, %s222
    %p231 = scmp.eq.s32.totalorder %s22, 0
    %p232 = por %p230, %p231
    %p233 = scmp.ne.s32.totalorder %s221, %s222
    %p234 = scmp.eq.s32.totalorder %s23, 1
    %p235 = por %p233, %p234
    %p237 = scmp.ne.s32.totalorder %s222, %s236
    %p238 = scmp.eq.s32.totalorder %s23, 0
    %p239 = por %p237, %p238
    %s240 = ssub.s32 %s17, %s24
    %p241 = scmp.eq.s32.totalorder %s240, 0
    %s243 = sadd.s32 %s242, 1
    %s244 = scalar_select %p241, %s242, %s243
    %p247 = pneg %p241
    %p248 = scmp.eq.s32.totalorder %s17, 1
    %p249 = por %p247, %p248
    %p250 = scmp.ne.s32.totalorder %s242, %s245
    %p251 = scmp.eq.s32.totalorder %s17, 0
    %p252 = por %p250, %p251
    %p253 = scmp.ne.s32.totalorder %s242, %s245
    %p254 = scmp.eq.s32.totalorder %s22, 1
    %p255 = por %p253, %p254
    %p256 = scmp.ne.s32.totalorder %s245, %s246
    %p257 = scmp.eq.s32.totalorder %s22, 0
    %p258 = por %p256, %p257
    %p259 = scmp.ne.s32.totalorder %s245, %s246
    %p260 = scmp.eq.s32.totalorder %s23, 1
    %p261 = por %p259, %p260
    %p263 = scmp.ne.s32.totalorder %s246, %s262
    %p264 = scmp.eq.s32.totalorder %s23, 0
    %p265 = por %p263, %p264
    %p266 = scmp.le.s32.totalorder 1, %s17
    %p267 = scmp.lt.s32.totalorder %s17, 3
    %p268 = pnand %p266, %p267
    %p269 = pneg %p268
    // Predicated region
    $region9: #{residual_block_forward.1} parent=5 // pred_check
      _
    $region10: #{residual_block_forward.1} parent=5 // pred_check_branch
      %271 = sbr.rel (%p268) target = $region12
    $region11: #{residual_block_forward.1} parent=5 // pred_region
      %s272 = ssub.s32 %s17, 1
      // Predicated region
      $region13: #{residual_block_forward.1} parent=11 // pred_check
        %p273 = pneg %p64
      $region14: #{residual_block_forward.1} parent=11 // pred_check_branch
        %275 = sbr.rel (%p273) target = $region16
      $region15: #{residual_block_forward.1} parent=11 // pred_region
        _
      $region16: #{residual_block_forward.1} parent=11 // pred_fallthru
        _
      // Predicated region
      $region17: #{residual_block_forward.1} parent=11 // pred_check
        %p276 = pneg %p85
      $region18: #{residual_block_forward.1} parent=11 // pred_check_branch
        %278 = sbr.rel (%p276) target = $region20
      $region19: #{residual_block_forward.1} parent=11 // pred_region
        _
      $region20: #{residual_block_forward.1} parent=11 // pred_fallthru
        _
      // Predicated region
      $region21: #{residual_block_forward.1} parent=11 // pred_check
        %p279 = pneg %p106
      $region22: #{residual_block_forward.1} parent=11 // pred_check_branch
        %281 = sbr.rel (%p279) target = $region24
      $region23: #{residual_block_forward.1} parent=11 // pred_region
        _
      $region24: #{residual_block_forward.1} parent=11 // pred_fallthru
        _
      // Predicated region
      $region25: #{residual_block_forward.1} parent=11 // pred_check
        %p282 = pneg %p127
      $region26: #{residual_block_forward.1} parent=11 // pred_check_branch
        %284 = sbr.rel (%p282) target = $region28
      $region27: #{residual_block_forward.1} parent=11 // pred_region
        _
      $region28: #{residual_block_forward.1} parent=11 // pred_fallthru
        _
      // Predicated region
      $region29: #{residual_block_forward.1} parent=11 // pred_check
        %p285 = pneg %p148
      $region30: #{residual_block_forward.1} parent=11 // pred_check_branch
        %287 = sbr.rel (%p285) target = $region32
      $region31: #{residual_block_forward.1} parent=11 // pred_region
        _
      $region32: #{residual_block_forward.1} parent=11 // pred_fallthru
        _
      // Predicated region
      $region33: #{residual_block_forward.1} parent=11 // pred_check
        %p288 = pneg %p169
      $region34: #{residual_block_forward.1} parent=11 // pred_check_branch
        %290 = sbr.rel (%p288) target = $region36
      $region35: #{residual_block_forward.1} parent=11 // pred_region
        _
      $region36: #{residual_block_forward.1} parent=11 // pred_fallthru
        _
      // Predicated region
      $region37: #{residual_block_forward.1} parent=11 // pred_check
        %p291 = pneg %p190
      $region38: #{residual_block_forward.1} parent=11 // pred_check_branch
        %293 = sbr.rel (%p291) target = $region40
      $region39: #{residual_block_forward.1} parent=11 // pred_region
        _
      $region40: #{residual_block_forward.1} parent=11 // pred_fallthru
        _
      // Predicated region
      $region41: #{residual_block_forward.1} parent=11 // pred_check
        %p294 = pneg %p211
      $region42: #{residual_block_forward.1} parent=11 // pred_check_branch
        %296 = sbr.rel (%p294) target = $region44
      $region43: #{residual_block_forward.1} parent=11 // pred_region
        _
      $region44: #{residual_block_forward.1} parent=11 // pred_fallthru
        _
      // Predicated region
      $region45: #{residual_block_forward.1} parent=11 // pred_check
        %p297 = pneg %p232
      $region46: #{residual_block_forward.1} parent=11 // pred_check_branch
        %299 = sbr.rel (%p297) target = $region48
      $region47: #{residual_block_forward.1} parent=11 // pred_region
        _
      $region48: #{residual_block_forward.1} parent=11 // pred_fallthru
        _
    $region12: #{residual_block_forward.1} parent=5 // pred_fallthru
      _
    %p300 = scmp.lt.s32.totalorder %s17, 2
    // Predicated region
    $region49: #{residual_block_forward.1} parent=5 // pred_check
      %p301 = pneg %p300
    $region50: #{residual_block_forward.1} parent=5 // pred_check_branch
      %303 = sbr.rel (%p301) target = $region52
    $region51: #{residual_block_forward.1} parent=5 // pred_region
      // Predicated region
      $region53: #{residual_block_forward.1} parent=51 // pred_check
        %p304 = pneg %p37
      $region54: #{residual_block_forward.1} parent=51 // pred_check_branch
        %306 = sbr.rel (%p304) target = $region56
      $region55: #{residual_block_forward.1} parent=51 // pred_region
        %p307 = scmp.lt.s32.totalorder %s17, 1
        %s308 = scalar_select %p307, %s17, 1
        %s309 = smul.addr %s308, 2
        %s310 = smul.addr %s309, 8
        %s311 = scalar_lea.vmem %s0, %s310
      $region56: #{residual_block_forward.1} parent=51 // pred_fallthru
        _
    $region52: #{residual_block_forward.1} parent=5 // pred_fallthru
      _
    %p312 = scmp.le.s32.totalorder 1, %s17
    %p313 = scmp.lt.s32.totalorder %s17, 3
    %p314 = pnand %p312, %p313
    %p315 = pneg %p314
    // Predicated region
    $region57: #{residual_block_forward.1} parent=5 // pred_check
      _
    $region58: #{residual_block_forward.1} parent=5 // pred_check_branch
      %317 = sbr.rel (%p314) target = $region60
    $region59: #{residual_block_forward.1} parent=5 // pred_region
      %s318 = ssub.s32 %s17, 1
      %p319 = scmp.lt.s32.totalorder %s22, 1
      %s320 = scalar_select %p319, %s22, 1
      %s321 = smul.addr %s320, 2
      %s322 = smul.addr %s321, 8
      %s323 = scalar_lea.vmem %s0, %s322
      %p324 = pneg %p43
      %p325 = pneg %p40
      %p326 = pneg %p64
      %p327 = pneg %p61
      %p328 = pneg %p85
      %p329 = pneg %p82
      %p330 = pneg %p106
      %p331 = pneg %p103
      %p332 = pneg %p127
      %p333 = pneg %p124
      %p334 = pneg %p148
      %p335 = pneg %p145
      %p336 = pneg %p169
      %p337 = pneg %p166
      %p338 = pneg %p190
      %p339 = pneg %p187
      %p340 = pneg %p211
      %p341 = pneg %p208
      %p342 = pneg %p232
      %p343 = pneg %p229
      %p344 = pneg %p258
      %p345 = pneg %p255
      %p346 = scmp.lt.s32.totalorder %s22, 1
      %s347 = scalar_select %p346, %s22, 1
      %s348 = smul.addr %s347, 2
      %s349 = smul.addr %s348, 8
      %s350 = scalar_lea.vmem %s10, %s349
      %p351 = scmp.lt.s32.totalorder %s22, 1
      %s352 = scalar_select %p351, %s22, 1
      %s353 = smul.addr %s352, 2
      %s354 = smul.addr %s353, 8
      %s355 = scalar_lea.vmem %s0, %s354
      %p356 = scmp.lt.s32.totalorder %s22, 1
      %s357 = scalar_select %p356, %s22, 1
      %s358 = smul.addr %s357, 2
      %s359 = smul.addr %s358, 8
      %s360 = scalar_lea.vmem %s10, %s359
      %v364 = vld [vmem:[%s355] sm:$0xff]
      %v365 = vld [vmem:[%s355 + $0x8] sm:$0xff]
      %v366 = vlaneseq
      %v367 = vand.u32 %v366, 127
      %v368 = vadd.s32 %v367, 128
      %vm369 = vcmp.lt.s32.totalorder %v367, 0
      %v370 = vsub.s32 0, %v367
      %v371 = vsel %vm369, %v370, %v367
      %v372 = vshrl.u32 %v371, 4
      %v373 = vand.u32 %v371, 15
      %v374 = vsub.s32 0, %v373
      %v375 = vsel %vm369, %v374, %v373
      %vm376 = vcmp.lt.s32.totalorder %v368, 0
      %v377 = vsub.s32 0, %v368
      %v378 = vsel %vm376, %v377, %v368
      %v379 = vshrl.u32 %v378, 4
      %v380 = vand.u32 %v378, 15
      %v381 = vsub.s32 0, %v380
      %v382 = vsel %vm376, %v381, %v380
      %vm383 = vcmp.ne.s32.totalorder %v375, 0
      %vm384 = vcmp.ne.s32.totalorder %v382, 0
      %vm385 = vcmp.lt.s32.totalorder %v375, 0
      %vm386 = vcmp.lt.s32.totalorder %v382, 0
      %vm387 = vmand %vm385, %vm383
      %vm388 = vmand %vm386, %vm384
      %v389 = vadd.s32 %v375, 16
      %v390 = vadd.s32 %v382, 16
      %v391 = vsel %vm387, %v389, %v375
      %v392 = vsel %vm388, %v390, %v382
      %v393 = vpack.c.bf16 %v365, %v364
      %v394 = vpack.c.bf16 0.0, 0.0
      %v397 = vunpack.c.l.b16 %v393
      %v398 = vunpack.c.h.b16 %v393
      %v399 = vunpack.c.l.b16 %v394
      %v400 = vunpack.c.h.b16 %v394
      %v401 = vpack.c.b16 %v399, %v397
      %v402 = vpack.c.b16 %v400, %v398
      %v405 = vadd.s32 %v391, 4294967295
      %v406 = vadd.s32 %v392, 4294967295
      %vm407 = vcmp.ge.s32.totalorder %v405, 0
      %vm408 = vcmp.ge.s32.totalorder %v406, 0
      %vm409 = vcmp.lt.s32.totalorder %v405, 16
      %vm410 = vcmp.lt.s32.totalorder %v406, 16
      %vm411 = vmand %vm407, %vm409
      %vm412 = vmand %vm408, %vm410
      %v413 = vsel %vm411, 1, 0
      %v414 = vsel %vm412, 1, 0
      %vm415 = vcmp.eq.s32.totalorder %v413, 1
      %vm416 = vcmp.eq.s32.totalorder %v414, 1
      %vm417 = vmpackc.low %vm416, %vm415
      %v418 = vsel %vm417, 65537, 0
      %v419 = vperm.slane %v418, 0
      %v420 = vperm.slane %v418, 4
      %421 = vrot.lane.b32.xlu0 %v419, 111
      %v422 = vpop.permute.xlu0 %421
      %423 = vrot.lane.b32.xlu0 %v420, 111
      %v424 = vpop.permute.xlu0 %423
      %vm425 = vcmask 908288
      %v426 = vsel %vm425, %v422, %v424
      %v427 = vunpack.c.l.b16 %v426
      %v428 = vunpack.c.h.b16 %v426
      %v429 = vunpack.c.l.b16 0
      %v430 = vunpack.c.h.b16 0
      %vm431 = vcmp.ne.s32.totalorder %v427, %v429
      %vm432 = vcmp.ne.s32.totalorder %v428, %v430
      %vm433 = vmpackc.low %vm432, %vm431
      %v434 = vunpack.c.l.b16 %v424
      %v435 = vunpack.c.h.b16 %v424
      %v436 = vunpack.c.l.b16 0
      %v437 = vunpack.c.h.b16 0
      %vm438 = vcmp.ne.s32.totalorder %v434, %v436
      %vm439 = vcmp.ne.s32.totalorder %v435, %v437
      %vm440 = vmpackc.low %vm439, %vm438
      %v441 = vsel %vm433, %v401, 0
      %v442 = vsel %vm440, %v402, 0
      %v443 = vadd.s32 %v391, 1
      %v444 = vadd.s32 %v392, 1
      %vm445 = vcmp.ge.s32.totalorder %v443, 0
      %vm446 = vcmp.ge.s32.totalorder %v444, 0
      %vm447 = vcmp.lt.s32.totalorder %v443, 16
      %vm448 = vcmp.lt.s32.totalorder %v444, 16
      %vm449 = vmand %vm445, %vm447
      %vm450 = vmand %vm446, %vm448
      %v451 = vsel %vm449, 1, 0
      %v452 = vsel %vm450, 1, 0
      %vm453 = vcmp.eq.s32.totalorder %v451, 1
      %vm454 = vcmp.eq.s32.totalorder %v452, 1
      %vm455 = vmpackc.low %vm454, %vm453
      %v456 = vsel %vm455, 65537, 0
      %v457 = vperm.slane %v456, 0
      %v458 = vperm.slane %v456, 4
      %459 = vrot.lane.b32.xlu0 %v457, 113
      %v460 = vpop.permute.xlu0 %459
      %461 = vrot.lane.b32.xlu0 %v458, 113
      %v462 = vpop.permute.xlu0 %461
      %vm463 = vcmask 924672
      %v464 = vsel %vm463, %v460, %v462
      %v465 = vunpack.c.l.b16 %v464
      %v466 = vunpack.c.h.b16 %v464
      %v467 = vunpack.c.l.b16 0
      %v468 = vunpack.c.h.b16 0
      %vm469 = vcmp.ne.s32.totalorder %v465, %v467
      %vm470 = vcmp.ne.s32.totalorder %v466, %v468
      %vm471 = vmpackc.low %vm470, %vm469
      %v472 = vunpack.c.l.b16 %v462
      %v473 = vunpack.c.h.b16 %v462
      %v474 = vunpack.c.l.b16 0
      %v475 = vunpack.c.h.b16 0
      %vm476 = vcmp.ne.s32.totalorder %v472, %v474
      %vm477 = vcmp.ne.s32.totalorder %v473, %v475
      %vm478 = vmpackc.low %vm477, %vm476
      %v479 = vsel %vm471, %v401, 0
      %v480 = vsel %vm478, %v402, 0
      %481 = vrot.lane.b32.xlu0 %v419, 127
      %v482 = vpop.permute.xlu0 %481
      %483 = vrot.lane.b32.xlu0 %v420, 127
      %v484 = vpop.permute.xlu0 %483
      %vm485 = vcmask 1039360
      %v486 = vsel %vm485, %v482, %v484
      %v487 = vunpack.c.l.b16 %v486
      %v488 = vunpack.c.h.b16 %v486
      %v489 = vunpack.c.l.b16 0
      %v490 = vunpack.c.h.b16 0
      %vm491 = vcmp.ne.s32.totalorder %v487, %v489
      %vm492 = vcmp.ne.s32.totalorder %v488, %v490
      %vm493 = vmpackc.low %vm492, %vm491
      %v494 = vunpack.c.l.b16 %v484
      %v495 = vunpack.c.h.b16 %v484
      %v496 = vunpack.c.l.b16 0
      %v497 = vunpack.c.h.b16 0
      %vm498 = vcmp.ne.s32.totalorder %v494, %v496
      %vm499 = vcmp.ne.s32.totalorder %v495, %v497
      %vm500 = vmpackc.low %vm499, %vm498
      %v501 = vsel %vm493, %v401, 0
      %v502 = vsel %vm500, %v402, 0
      %503 = vrot.lane.b32.xlu0 %v457, 1
      %v504 = vpop.permute.xlu0 %503
      %505 = vrot.lane.b32.xlu0 %v458, 1
      %v506 = vpop.permute.xlu0 %505
      %vm507 = vcmask 7168
      %v508 = vsel %vm507, %v504, %v506
      %v509 = vunpack.c.l.b16 %v504
      %v510 = vunpack.c.h.b16 %v504
      %v511 = vunpack.c.l.b16 0
      %v512 = vunpack.c.h.b16 0
      %vm513 = vcmp.ne.s32.totalorder %v509, %v511
      %vm514 = vcmp.ne.s32.totalorder %v510, %v512
      %vm515 = vmpackc.low %vm514, %vm513
      %v516 = vunpack.c.l.b16 %v508
      %v517 = vunpack.c.h.b16 %v508
      %v518 = vunpack.c.l.b16 0
      %v519 = vunpack.c.h.b16 0
      %vm520 = vcmp.ne.s32.totalorder %v516, %v518
      %vm521 = vcmp.ne.s32.totalorder %v517, %v519
      %vm522 = vmpackc.low %vm521, %vm520
      %v523 = vsel %vm515, %v401, 0
      %v524 = vsel %vm522, %v402, 0
      %525 = vrot.lane.b32.xlu0 %v419, 15
      %v526 = vpop.permute.xlu0 %525
      %527 = vrot.lane.b32.xlu0 %v420, 15
      %v528 = vpop.permute.xlu0 %527
      %vm529 = vcmask 121856
      %v530 = vsel %vm529, %v526, %v528
      %v531 = vunpack.c.l.b16 %v526
      %v532 = vunpack.c.h.b16 %v526
      %v533 = vunpack.c.l.b16 0
      %v534 = vunpack.c.h.b16 0
      %vm535 = vcmp.ne.s32.totalorder %v531, %v533
      %vm536 = vcmp.ne.s32.totalorder %v532, %v534
      %vm537 = vmpackc.low %vm536, %vm535
      %v538 = vunpack.c.l.b16 %v530
      %v539 = vunpack.c.h.b16 %v530
      %v540 = vunpack.c.l.b16 0
      %v541 = vunpack.c.h.b16 0
      %vm542 = vcmp.ne.s32.totalorder %v538, %v540
      %vm543 = vcmp.ne.s32.totalorder %v539, %v541
      %vm544 = vmpackc.low %vm543, %vm542
      %v545 = vsel %vm537, %v401, 0
      %v546 = vsel %vm544, %v402, 0
      %547 = vrot.lane.b32.xlu0 %v457, 17
      %v548 = vpop.permute.xlu0 %547
      %549 = vrot.lane.b32.xlu0 %v458, 17
      %v550 = vpop.permute.xlu0 %549
      %vm551 = vcmask 138240
      %v552 = vsel %vm551, %v548, %v550
      %v553 = vunpack.c.l.b16 %v548
      %v554 = vunpack.c.h.b16 %v548
      %v555 = vunpack.c.l.b16 0
      %v556 = vunpack.c.h.b16 0
      %vm557 = vcmp.ne.s32.totalorder %v553, %v555
      %vm558 = vcmp.ne.s32.totalorder %v554, %v556
      %vm559 = vmpackc.low %vm558, %vm557
      %v560 = vunpack.c.l.b16 %v552
      %v561 = vunpack.c.h.b16 %v552
      %v562 = vunpack.c.l.b16 0
      %v563 = vunpack.c.h.b16 0
      %vm564 = vcmp.ne.s32.totalorder %v560, %v562
      %vm565 = vcmp.ne.s32.totalorder %v561, %v563
      %vm566 = vmpackc.low %vm565, %vm564
      %v567 = vsel %vm559, %v401, 0
      %v568 = vsel %vm566, %v402, 0
      %570 = vrot.lane.b32.xlu0 0, 127
      %v571 = vpop.permute.xlu0 %570
      %572 = vrot.lane.b32.xlu0 %v401, 127
      %v573 = vpop.permute.xlu0 %572
      %574 = vrot.lane.b32.xlu0 %v402, 127
      %v575 = vpop.permute.xlu0 %574
      %v576 = vsel %vm485, %v571, %v573
      %v577 = vsel %vm485, %v573, %v575
      %580 = vrot.lane.b32.xlu0 0, 126
      %v581 = vpop.permute.xlu0 %580
      %582 = vrot.lane.b32.xlu0 %v479, 126
      %v583 = vpop.permute.xlu0 %582
      %584 = vrot.lane.b32.xlu0 %v480, 126
      %v585 = vpop.permute.xlu0 %584
      %vm586 = vcmask 1031168
      %v587 = vsel %vm586, %v581, %v583
      %v588 = vsel %vm586, %v583, %v585
      %591 = vrot.lane.b32.xlu0 0, 112
      %v592 = vpop.permute.xlu0 %591
      %593 = vrot.lane.b32.xlu0 %v501, 112
      %v594 = vpop.permute.xlu0 %593
      %595 = vrot.lane.b32.xlu0 %v502, 112
      %v596 = vpop.permute.xlu0 %595
      %vm597 = vcmask 916480
      %v598 = vsel %vm597, %v592, %v594
      %v599 = vsel %vm597, %v594, %v596
      %600 = vrot.lane.b32.xlu0 %v401, 111
      %v601 = vpop.permute.xlu0 %600
      %602 = vrot.lane.b32.xlu0 %v402, 111
      %v603 = vpop.permute.xlu0 %602
      %v604 = vsel %vm425, %v601, %v603
      %607 = vrot.lane.b32.xlu0 %v523, 110
      %v608 = vpop.permute.xlu0 %607
      %609 = vrot.lane.b32.xlu0 %v524, 110
      %v610 = vpop.permute.xlu0 %609
      %611 = vrot.lane.b32.xlu0 0, 110
      %v612 = vpop.permute.xlu0 %611
      %vm613 = vcmask 900096
      %v614 = vsel %vm613, %v608, %v610
      %v615 = vsel %vm613, %v610, %v612
      %618 = vrot.lane.b32.xlu0 %v545, 96
      %v619 = vpop.permute.xlu0 %618
      %620 = vrot.lane.b32.xlu0 %v546, 96
      %v621 = vpop.permute.xlu0 %620
      %622 = vrot.lane.b32.xlu0 0, 96
      %v623 = vpop.permute.xlu0 %622
      %vm624 = vcmask 785408
      %v625 = vsel %vm624, %v619, %v621
      %v626 = vsel %vm624, %v621, %v623
      %627 = vrot.lane.b32.xlu0 %v401, 95
      %v628 = vpop.permute.xlu0 %627
      %629 = vrot.lane.b32.xlu0 %v402, 95
      %v630 = vpop.permute.xlu0 %629
      %631 = vrot.lane.b32.xlu0 0, 95
      %v632 = vpop.permute.xlu0 %631
      %vm633 = vcmask 777216
      %v634 = vsel %vm633, %v628, %v630
      %v635 = vsel %vm633, %v630, %v632
      %638 = vrot.lane.b32.xlu0 %v567, 94
      %v639 = vpop.permute.xlu0 %638
      %640 = vrot.lane.b32.xlu0 %v568, 94
      %v641 = vpop.permute.xlu0 %640
      %642 = vrot.lane.b32.xlu0 0, 94
      %v643 = vpop.permute.xlu0 %642
      %vm644 = vcmask 769024
      %v645 = vsel %vm644, %v639, %v641
      %v646 = vsel %vm644, %v641, %v643
      %v647 = vld [vmem:[%s1] sm:$0xff]
      %v649 = vunpack.c.l.b16 %v647
      %v650 = vunpack.c.h.b16 %v647
      %v651 = vpack.c.b16 %v649, %v649
      %v652 = vpack.c.b16 %v650, %v650
      %656 = vrot.lane.b32.xlu0 0, 17
      %v657 = vpop.permute.xlu0 %656
      %658 = vrot.lane.b32.xlu0 %v441, 17
      %v659 = vpop.permute.xlu0 %658
      %660 = vrot.lane.b32.xlu0 %v442, 17
      %v661 = vpop.permute.xlu0 %660
      %662 = vrot.lane.b32.xlu0 %v576, 17
      %v663 = vpop.permute.xlu0 %662
      %664 = vrot.lane.b32.xlu0 %v577, 17
      %v665 = vpop.permute.xlu0 %664
      %666 = vrot.lane.b32.xlu0 %v575, 17
      %v667 = vpop.permute.xlu0 %666
      %668 = vrot.lane.b32.xlu0 %v587, 17
      %v669 = vpop.permute.xlu0 %668
      %670 = vrot.lane.b32.xlu0 %v588, 17
      %v671 = vpop.permute.xlu0 %670
      %672 = vrot.lane.b32.xlu0 %v585, 17
      %v673 = vpop.permute.xlu0 %672
      %674 = vrot.lane.b32.xlu0 %v598, 17
      %v675 = vpop.permute.xlu0 %674
      %676 = vrot.lane.b32.xlu0 %v599, 17
      %v677 = vpop.permute.xlu0 %676
      %678 = vrot.lane.b32.xlu0 %v596, 17
      %v679 = vpop.permute.xlu0 %678
      %680 = vrot.lane.b32.xlu0 %v601, 17
      %v681 = vpop.permute.xlu0 %680
      %682 = vrot.lane.b32.xlu0 %v604, 17
      %v683 = vpop.permute.xlu0 %682
      %684 = vrot.lane.b32.xlu0 %v603, 17
      %v685 = vpop.permute.xlu0 %684
      %686 = vrot.lane.b32.xlu0 %v608, 17
      %v687 = vpop.permute.xlu0 %686
      %688 = vrot.lane.b32.xlu0 %v614, 17
      %v689 = vpop.permute.xlu0 %688
      %690 = vrot.lane.b32.xlu0 %v615, 17
      %v691 = vpop.permute.xlu0 %690
      %692 = vrot.lane.b32.xlu0 %v619, 17
      %v693 = vpop.permute.xlu0 %692
      %694 = vrot.lane.b32.xlu0 %v625, 17
      %v695 = vpop.permute.xlu0 %694
      %696 = vrot.lane.b32.xlu0 %v626, 17
      %v697 = vpop.permute.xlu0 %696
      %698 = vrot.lane.b32.xlu0 %v628, 17
      %v699 = vpop.permute.xlu0 %698
      %700 = vrot.lane.b32.xlu0 %v634, 17
      %v701 = vpop.permute.xlu0 %700
      %702 = vrot.lane.b32.xlu0 %v635, 17
      %v703 = vpop.permute.xlu0 %702
      %704 = vrot.lane.b32.xlu0 %v639, 17
      %v705 = vpop.permute.xlu0 %704
      %706 = vrot.lane.b32.xlu0 %v645, 17
      %v707 = vpop.permute.xlu0 %706
      %708 = vrot.lane.b32.xlu0 %v646, 17
      %v709 = vpop.permute.xlu0 %708
      %v710 = vsel %vm551, %v657, %v659
      %v711 = vsel %vm551, %v659, %v661
      %v712 = vsel %vm551, %v663, %v665
      %v713 = vsel %vm551, %v665, %v667
      %v714 = vsel %vm551, %v669, %v671
      %v715 = vsel %vm551, %v671, %v673
      %v716 = vsel %vm551, %v675, %v677
      %v717 = vsel %vm551, %v677, %v679
      %v718 = vsel %vm551, %v681, %v683
      %v719 = vsel %vm551, %v683, %v685
      %v720 = vsel %vm551, %v687, %v689
      %v721 = vsel %vm551, %v689, %v691
      %v722 = vsel %vm551, %v693, %v695
      %v723 = vsel %vm551, %v695, %v697
      %v724 = vsel %vm551, %v699, %v701
      %v725 = vsel %vm551, %v701, %v703
      %v726 = vsel %vm551, %v705, %v707
      %v727 = vsel %vm551, %v707, %v709
      %vm746 = vcmask 130048
      %v748 = vsel %vm746, %v652, 0
      %750 = vmatpush.bf16.msra.mxu0 %v724
      %751 = vmatpush.bf16.msra.mxu0 %v722
      %752 = vmatpush.bf16.msra.mxu0 %v720
      %753 = vmatpush.bf16.msra.mxu0 %v718
      %754 = vmatpush.bf16.msra.mxu0 %v716
      %755 = vmatpush.bf16.msra.mxu0 %v714
      %756 = vmatpush.bf16.msra.mxu0 %v712
      %757 = vmatpush.bf16.msra.mxu0 %v710
      %758 = vmatmul.bf16.gmra.mxu0 %v651
      %v759 = vpop.f32.mrf.mxu0
      %v760 = vadd.f32 0.0, %v759
      %v761 = vpop.f32.mrf.mxu0
      %762 = vdwg.mxu0
      %763 = vmatpush.bf16.msra.mxu0 0
      %764 = vmatpush.bf16.msra.mxu0 0
      %765 = vmatpush.bf16.msra.mxu0 0
      %766 = vmatpush.bf16.msra.mxu0 0
      %767 = vmatpush.bf16.msra.mxu0 0
      %768 = vmatpush.bf16.msra.mxu0 0
      %769 = vmatpush.bf16.msra.mxu0 0
      %770 = vmatpush.bf16.msra.mxu0 %v726
      %771 = vmatmul.bf16.gmra.mxu0 %v748
      %v772 = vpop.f32.mrf.mxu0
      %v773 = vadd.f32 %v760, %v772
      %v774 = vpop.f32.mrf.mxu0
      %775 = vdwg.mxu0
      %776 = vmatpush.bf16.msra.mxu0 %v725
      %777 = vmatpush.bf16.msra.mxu0 %v723
      %778 = vmatpush.bf16.msra.mxu0 %v721
      %779 = vmatpush.bf16.msra.mxu0 %v719
      %780 = vmatpush.bf16.msra.mxu0 %v717
      %781 = vmatpush.bf16.msra.mxu0 %v715
      %782 = vmatpush.bf16.msra.mxu0 %v713
      %783 = vmatpush.bf16.msra.mxu0 %v711
      %784 = vmatmul.bf16.gmra.mxu0 %v651
      %v785 = vpop.f32.mrf.mxu0
      %v786 = vadd.f32 0.0, %v785
      %v787 = vpop.f32.mrf.mxu0
      %788 = vdwg.mxu0
      %789 = vmatpush.bf16.msra.mxu0 0
      %790 = vmatpush.bf16.msra.mxu0 0
      %791 = vmatpush.bf16.msra.mxu0 0
      %792 = vmatpush.bf16.msra.mxu0 0
      %793 = vmatpush.bf16.msra.mxu0 0
      %794 = vmatpush.bf16.msra.mxu0 0
      %795 = vmatpush.bf16.msra.mxu0 0
      %796 = vmatpush.bf16.msra.mxu0 %v727
      %797 = vmatmul.bf16.gmra.mxu0 %v748
      %v798 = vpop.f32.mrf.mxu0
      %v799 = vadd.f32 %v786, %v798
      %v800 = vpop.f32.mrf.mxu0
      %801 = vdwg.mxu0
      %v802 = vld [vmem:[%s2] sm:$0xff]
      %804 = vset.pattern.permute.xlu0 0
      %805 = vperm.xlu0 %804, %v802
      %v806 = vpop.permute.xlu0 %805
      %v808 = vmul.f32 %v773, %v806
      %v809 = vmul.f32 %v799, %v806
      %v810 = vld [vmem:[%s3] sm:$0xff]
      %812 = vset.pattern.permute.xlu0 0
      %813 = vperm.xlu0 %812, %v810
      %v814 = vpop.permute.xlu0 %813
      %v816 = vadd.f32 %v808, %v814
      %v817 = vadd.f32 %v809, %v814
      %v818 = vmax.f32 %v816, 0.0
      %v819 = vmax.f32 %v817, 0.0
      %v820 = vpack.c.bf16 %v819, %v818
      %v822 = vunpack.c.l.b16 %v820
      %v823 = vunpack.c.h.b16 %v820
      %v824 = vpack.c.b16 %v399, %v822
      %v825 = vpack.c.b16 %v400, %v823
      %v828 = vsel %vm433, %v824, 0
      %v829 = vsel %vm440, %v825, 0
      %v830 = vsel %vm471, %v824, 0
      %v831 = vsel %vm478, %v825, 0
      %v832 = vsel %vm493, %v824, 0
      %v833 = vsel %vm500, %v825, 0
      %v834 = vsel %vm515, %v824, 0
      %v835 = vsel %vm522, %v825, 0
      %v836 = vsel %vm537, %v824, 0
      %v837 = vsel %vm544, %v825, 0
      %v838 = vsel %vm559, %v824, 0
      %v839 = vsel %vm566, %v825, 0
      %840 = vrot.lane.b32.xlu0 %v824, 127
      %v841 = vpop.permute.xlu0 %840
      %842 = vrot.lane.b32.xlu0 %v825, 127
      %v843 = vpop.permute.xlu0 %842
      %v844 = vsel %vm485, %v571, %v841
      %v845 = vsel %vm485, %v841, %v843
      %848 = vrot.lane.b32.xlu0 %v830, 126
      %v849 = vpop.permute.xlu0 %848
      %850 = vrot.lane.b32.xlu0 %v831, 126
      %v851 = vpop.permute.xlu0 %850
      %v852 = vsel %vm586, %v581, %v849
      %v853 = vsel %vm586, %v849, %v851
      %856 = vrot.lane.b32.xlu0 %v832, 112
      %v857 = vpop.permute.xlu0 %856
      %858 = vrot.lane.b32.xlu0 %v833, 112
      %v859 = vpop.permute.xlu0 %858
      %v860 = vsel %vm597, %v592, %v857
      %v861 = vsel %vm597, %v857, %v859
      %862 = vrot.lane.b32.xlu0 %v824, 111
      %v863 = vpop.permute.xlu0 %862
      %864 = vrot.lane.b32.xlu0 %v825, 111
      %v865 = vpop.permute.xlu0 %864
      %v866 = vsel %vm425, %v863, %v865
      %869 = vrot.lane.b32.xlu0 %v834, 110
      %v870 = vpop.permute.xlu0 %869
      %871 = vrot.lane.b32.xlu0 %v835, 110
      %v872 = vpop.permute.xlu0 %871
      %v873 = vsel %vm613, %v870, %v872
      %v874 = vsel %vm613, %v872, %v612
      %877 = vrot.lane.b32.xlu0 %v836, 96
      %v878 = vpop.permute.xlu0 %877
      %879 = vrot.lane.b32.xlu0 %v837, 96
      %v880 = vpop.permute.xlu0 %879
      %v881 = vsel %vm624, %v878, %v880
      %v882 = vsel %vm624, %v880, %v623
      %883 = vrot.lane.b32.xlu0 %v824, 95
      %v884 = vpop.permute.xlu0 %883
      %885 = vrot.lane.b32.xlu0 %v825, 95
      %v886 = vpop.permute.xlu0 %885
      %v887 = vsel %vm633, %v884, %v886
      %v888 = vsel %vm633, %v886, %v632
      %891 = vrot.lane.b32.xlu0 %v838, 94
      %v892 = vpop.permute.xlu0 %891
      %893 = vrot.lane.b32.xlu0 %v839, 94
      %v894 = vpop.permute.xlu0 %893
      %v895 = vsel %vm644, %v892, %v894
      %v896 = vsel %vm644, %v894, %v643
      %v897 = vld [vmem:[%s4] sm:$0xff]
      %v899 = vunpack.c.l.b16 %v897
      %v900 = vunpack.c.h.b16 %v897
      %v901 = vpack.c.b16 %v899, %v899
      %v902 = vpack.c.b16 %v900, %v900
      %906 = vrot.lane.b32.xlu0 %v828, 17
      %v907 = vpop.permute.xlu0 %906
      %908 = vrot.lane.b32.xlu0 %v829, 17
      %v909 = vpop.permute.xlu0 %908
      %910 = vrot.lane.b32.xlu0 %v844, 17
      %v911 = vpop.permute.xlu0 %910
      %912 = vrot.lane.b32.xlu0 %v845, 17
      %v913 = vpop.permute.xlu0 %912
      %914 = vrot.lane.b32.xlu0 %v843, 17
      %v915 = vpop.permute.xlu0 %914
      %916 = vrot.lane.b32.xlu0 %v852, 17
      %v917 = vpop.permute.xlu0 %916
      %918 = vrot.lane.b32.xlu0 %v853, 17
      %v919 = vpop.permute.xlu0 %918
      %920 = vrot.lane.b32.xlu0 %v851, 17
      %v921 = vpop.permute.xlu0 %920
      %922 = vrot.lane.b32.xlu0 %v860, 17
      %v923 = vpop.permute.xlu0 %922
      %924 = vrot.lane.b32.xlu0 %v861, 17
      %v925 = vpop.permute.xlu0 %924
      %926 = vrot.lane.b32.xlu0 %v859, 17
      %v927 = vpop.permute.xlu0 %926
      %928 = vrot.lane.b32.xlu0 %v863, 17
      %v929 = vpop.permute.xlu0 %928
      %930 = vrot.lane.b32.xlu0 %v866, 17
      %v931 = vpop.permute.xlu0 %930
      %932 = vrot.lane.b32.xlu0 %v865, 17
      %v933 = vpop.permute.xlu0 %932
      %934 = vrot.lane.b32.xlu0 %v870, 17
      %v935 = vpop.permute.xlu0 %934
      %936 = vrot.lane.b32.xlu0 %v873, 17
      %v937 = vpop.permute.xlu0 %936
      %938 = vrot.lane.b32.xlu0 %v874, 17
      %v939 = vpop.permute.xlu0 %938
      %940 = vrot.lane.b32.xlu0 %v878, 17
      %v941 = vpop.permute.xlu0 %940
      %942 = vrot.lane.b32.xlu0 %v881, 17
      %v943 = vpop.permute.xlu0 %942
      %944 = vrot.lane.b32.xlu0 %v882, 17
      %v945 = vpop.permute.xlu0 %944
      %946 = vrot.lane.b32.xlu0 %v884, 17
      %v947 = vpop.permute.xlu0 %946
      %948 = vrot.lane.b32.xlu0 %v887, 17
      %v949 = vpop.permute.xlu0 %948
      %950 = vrot.lane.b32.xlu0 %v888, 17
      %v951 = vpop.permute.xlu0 %950
      %952 = vrot.lane.b32.xlu0 %v892, 17
      %v953 = vpop.permute.xlu0 %952
      %954 = vrot.lane.b32.xlu0 %v895, 17
      %v955 = vpop.permute.xlu0 %954
      %956 = vrot.lane.b32.xlu0 %v896, 17
      %v957 = vpop.permute.xlu0 %956
      %v958 = vsel %vm551, %v657, %v907
      %v959 = vsel %vm551, %v907, %v909
      %v960 = vsel %vm551, %v911, %v913
      %v961 = vsel %vm551, %v913, %v915
      %v962 = vsel %vm551, %v917, %v919
      %v963 = vsel %vm551, %v919, %v921
      %v964 = vsel %vm551, %v923, %v925
      %v965 = vsel %vm551, %v925, %v927
      %v966 = vsel %vm551, %v929, %v931
      %v967 = vsel %vm551, %v931, %v933
      %v968 = vsel %vm551, %v935, %v937
      %v969 = vsel %vm551, %v937, %v939
      %v970 = vsel %vm551, %v941, %v943
      %v971 = vsel %vm551, %v943, %v945
      %v972 = vsel %vm551, %v947, %v949
      %v973 = vsel %vm551, %v949, %v951
      %v974 = vsel %vm551, %v953, %v955
      %v975 = vsel %vm551, %v955, %v957
      %v995 = vsel %vm746, %v902, 0
      %997 = vmatpush.bf16.msra.mxu0 %v972
      %998 = vmatpush.bf16.msra.mxu0 %v970
      %999 = vmatpush.bf16.msra.mxu0 %v968
      %1000 = vmatpush.bf16.msra.mxu0 %v966
      %1001 = vmatpush.bf16.msra.mxu0 %v964
      %1002 = vmatpush.bf16.msra.mxu0 %v962
      %1003 = vmatpush.bf16.msra.mxu0 %v960
      %1004 = vmatpush.bf16.msra.mxu0 %v958
      %1005 = vmatmul.bf16.gmra.mxu0 %v901
      %v1006 = vpop.f32.mrf.mxu0
      %v1007 = vadd.f32 0.0, %v1006
      %v1008 = vpop.f32.mrf.mxu0
      %1009 = vdwg.mxu0
      %1010 = vmatpush.bf16.msra.mxu0 0
      %1011 = vmatpush.bf16.msra.mxu0 0
      %1012 = vmatpush.bf16.msra.mxu0 0
      %1013 = vmatpush.bf16.msra.mxu0 0
      %1014 = vmatpush.bf16.msra.mxu0 0
      %1015 = vmatpush.bf16.msra.mxu0 0
      %1016 = vmatpush.bf16.msra.mxu0 0
      %1017 = vmatpush.bf16.msra.mxu0 %v974
      %1018 = vmatmul.bf16.gmra.mxu0 %v995
      %v1019 = vpop.f32.mrf.mxu0
      %v1020 = vadd.f32 %v1007, %v1019
      %v1021 = vpop.f32.mrf.mxu0
      %1022 = vdwg.mxu0
      %1023 = vmatpush.bf16.msra.mxu0 %v973
      %1024 = vmatpush.bf16.msra.mxu0 %v971
      %1025 = vmatpush.bf16.msra.mxu0 %v969
      %1026 = vmatpush.bf16.msra.mxu0 %v967
      %1027 = vmatpush.bf16.msra.mxu0 %v965
      %1028 = vmatpush.bf16.msra.mxu0 %v963
      %1029 = vmatpush.bf16.msra.mxu0 %v961
      %1030 = vmatpush.bf16.msra.mxu0 %v959
      %1031 = vmatmul.bf16.gmra.mxu0 %v901
      %v1032 = vpop.f32.mrf.mxu0
      %v1033 = vadd.f32 0.0, %v1032
      %v1034 = vpop.f32.mrf.mxu0
      %1035 = vdwg.mxu0
      %1036 = vmatpush.bf16.msra.mxu0 0
      %1037 = vmatpush.bf16.msra.mxu0 0
      %1038 = vmatpush.bf16.msra.mxu0 0
      %1039 = vmatpush.bf16.msra.mxu0 0
      %1040 = vmatpush.bf16.msra.mxu0 0
      %1041 = vmatpush.bf16.msra.mxu0 0
      %1042 = vmatpush.bf16.msra.mxu0 0
      %1043 = vmatpush.bf16.msra.mxu0 %v975
      %1044 = vmatmul.bf16.gmra.mxu0 %v995
      %v1045 = vpop.f32.mrf.mxu0
      %v1046 = vadd.f32 %v1033, %v1045
      %v1047 = vpop.f32.mrf.mxu0
      %1048 = vdwg.mxu0
      %v1049 = vld [vmem:[%s5] sm:$0xff]
      %1051 = vset.pattern.permute.xlu0 0
      %1052 = vperm.xlu0 %1051, %v1049
      %v1053 = vpop.permute.xlu0 %1052
      %v1055 = vmul.f32 %v1020, %v1053
      %v1056 = vmul.f32 %v1046, %v1053
      %v1057 = vld [vmem:[%s6] sm:$0xff]
      %1059 = vset.pattern.permute.xlu0 0
      %1060 = vperm.xlu0 %1059, %v1057
      %v1061 = vpop.permute.xlu0 %1060
      %v1063 = vadd.f32 %v1055, %v1061
      %v1064 = vadd.f32 %v1056, %v1061
      %v1065 = vld [vmem:[%s7] sm:$0xf]
      %v1066 = vld [vmem:[%s7 + $0x4] sm:$0x1]
      %v1067 = vpack.c.bf16 %v1063, %v1063
      %v1068 = vpack.c.bf16 %v1064, %v1064
      %v1069 = vld [vmem:[%s8] sm:$0xff]
      %v1070 = vld [vmem:[%s8 + $0x8] sm:$0x3]
      %1072 = vset.pattern.permute.xlu0 0
      %1073 = vperm.xlu0 %1072, %v1069
      %v1074 = vpop.permute.xlu0 %1073
      %1077 = vset.pattern.permute.xlu0 0
      %1078 = vperm.xlu0 %1077, %v1070
      %v1079 = vpop.permute.xlu0 %1078
      %v1083 = vunpack.c.l.b16 %v1065
      %v1084 = vunpack.c.l.b16 %v1066
      %v1085 = vpack.c.b16 %v1084, %v1083
      %vm1086 = vcmask 64512
      %v1088 = vsel %vm1086, %v1085, 0
      %vm1090 = vcmask 1043456
      %v1092 = vsel %vm1090, %v1067, 0
      %v1095 = vsel %vm1090, %v1068, 0
      %1097 = vmatpush.bf16.msra.mxu0 0
      %1098 = vmatpush.bf16.msra.mxu0 0
      %1099 = vmatpush.bf16.msra.mxu0 0
      %1100 = vmatpush.bf16.msra.mxu0 0
      %1101 = vmatpush.bf16.msra.mxu0 0
      %1102 = vmatpush.bf16.msra.mxu0 0
      %1103 = vmatpush.bf16.msra.mxu0 0
      %1104 = vmatpush.bf16.msra.mxu0 %v1092
      %1105 = vmatmul.bf16.gmra.mxu0 %v1088
      %v1106 = vpop.f32.mrf.mxu0
      %v1107 = vadd.f32 %v1074, %v1106
      %v1108 = vpop.f32.mrf.mxu0
      %v1109 = vadd.f32 %v1079, %v1108
      %1110 = vdwg.mxu0
      %1111 = vmatpush.bf16.msra.mxu0 0
      %1112 = vmatpush.bf16.msra.mxu0 0
      %1113 = vmatpush.bf16.msra.mxu0 0
      %1114 = vmatpush.bf16.msra.mxu0 0
      %1115 = vmatpush.bf16.msra.mxu0 0
      %1116 = vmatpush.bf16.msra.mxu0 0
      %1117 = vmatpush.bf16.msra.mxu0 0
      %1118 = vmatpush.bf16.msra.mxu0 %v1095
      %1119 = vmatmul.bf16.gmra.mxu0 %v1088
      %v1120 = vpop.f32.mrf.mxu0
      %v1121 = vadd.f32 %v1074, %v1120
      %v1122 = vpop.f32.mrf.mxu0
      %v1123 = vadd.f32 %v1079, %v1122
      %1124 = vdwg.mxu0
      %v1125 = vpack.c.bf16 %v1109, %v1109
      %v1126 = vpack.c.bf16 %v1123, %v1123
      %v1128 = vshrl.u32 %v1125, 16
      %v1131 = vshrl.u32 %v1126, 16
      %1135 = vxpose.binary.xlu0.c.b16.start [1/16] %v1131, %v1128, 128
      %1136 = vxpose.binary.xlu0.c.b16.cont [2/16] 0, 0, 128
      %1137 = vxpose.binary.xlu0.c.b16.cont [3/16] 0, 0, 128
      %1138 = vxpose.binary.xlu0.c.b16.cont [4/16] 0, 0, 128
      %1139 = vxpose.binary.xlu0.c.b16.cont [5/16] 0, 0, 128
      %1140 = vxpose.binary.xlu0.c.b16.cont [6/16] 0, 0, 128
      %1141 = vxpose.binary.xlu0.c.b16.cont [7/16] 0, 0, 128
      %1142 = vxpose.binary.xlu0.c.b16.end [8/16] 0, 0, 128
      %v1143 = vpop.trf.xlu0
      %v1144 = vpop.trf.xlu0
      %v1145 = vpop.trf.xlu0
      %v1146 = vpop.trf.xlu0
      %v1147 = vpop.trf.xlu0
      %v1148 = vpop.trf.xlu0
      %v1149 = vpop.trf.xlu0
      %v1150 = vpop.trf.xlu0
      %v1151 = vpop.trf.xlu0
      %v1152 = vpop.trf.xlu0
      %v1153 = vpop.trf.xlu0
      %v1154 = vpop.trf.xlu0
      %v1155 = vpop.trf.xlu0
      %v1156 = vpop.trf.xlu0
      %v1157 = vpop.trf.xlu0
      %v1158 = vpop.trf.xlu0
      %vm1159 = vcmask 7168
      %v1161 = vsel %vm1159, %v1143, 0
      %v1164 = vsel %vm1159, %v1145, 0
      %v1167 = vsel %vm1159, %v1147, 0
      %v1170 = vsel %vm1159, %v1149, 0
      %v1173 = vsel %vm1159, %v1151, 0
      %v1176 = vsel %vm1159, %v1153, 0
      %v1179 = vsel %vm1159, %v1155, 0
      %v1182 = vsel %vm1159, %v1157, 0
      %v1185 = vsel %vm1159, %v1144, 0
      %v1188 = vsel %vm1159, %v1146, 0
      %v1191 = vsel %vm1159, %v1148, 0
      %v1194 = vsel %vm1159, %v1150, 0
      %v1197 = vsel %vm1159, %v1152, 0
      %v1200 = vsel %vm1159, %v1154, 0
      %v1203 = vsel %vm1159, %v1156, 0
      %v1206 = vsel %vm1159, %v1158, 0
      %vm1208 = vcmask 1040384
      %v1209 = vsel 0, 4294967295, 65535
      %v1210 = vsel %vm1208, %v1209, 0
      %v1211 = vand.u32 %v1125, %v1210
      %v1213 = vand.u32 %v1126, %v1210
      %1215 = vmatpush.bf16.msra.mxu0 0
      %1216 = vmatpush.bf16.msra.mxu0 0
      %1217 = vmatpush.bf16.msra.mxu0 0
      %1218 = vmatpush.bf16.msra.mxu0 0
      %1219 = vmatpush.bf16.msra.mxu0 0
      %1220 = vmatpush.bf16.msra.mxu0 0
      %1221 = vmatpush.bf16.msra.mxu0 0
      %1222 = vmatpush.bf16.msra.mxu0 %v1211
      %1223 = vmatmul.bf16.gmra.mxu0 %v1161
      %v1224 = vpop.f32.mrf.mxu0
      %v1225 = vadd.f32 0.0, %v1224
      %v1226 = vpop.f32.mrf.mxu0
      %v1227 = vadd.f32 0.0, %v1226
      %1228 = vmatmul.bf16.gmra.mxu0 %v1164
      %v1229 = vpop.f32.mrf.mxu0
      %v1230 = vadd.f32 0.0, %v1229
      %v1231 = vpop.f32.mrf.mxu0
      %v1232 = vadd.f32 0.0, %v1231
      %1233 = vmatmul.bf16.gmra.mxu0 %v1167
      %v1234 = vpop.f32.mrf.mxu0
      %v1235 = vadd.f32 0.0, %v1234
      %v1236 = vpop.f32.mrf.mxu0
      %v1237 = vadd.f32 0.0, %v1236
      %1238 = vmatmul.bf16.gmra.mxu0 %v1170
      %v1239 = vpop.f32.mrf.mxu0
      %v1240 = vadd.f32 0.0, %v1239
      %v1241 = vpop.f32.mrf.mxu0
      %v1242 = vadd.f32 0.0, %v1241
      %1243 = vmatmul.bf16.gmra.mxu0 %v1173
      %v1244 = vpop.f32.mrf.mxu0
      %v1245 = vadd.f32 0.0, %v1244
      %v1246 = vpop.f32.mrf.mxu0
      %v1247 = vadd.f32 0.0, %v1246
      %1248 = vmatmul.bf16.gmra.mxu0 %v1176
      %v1249 = vpop.f32.mrf.mxu0
      %v1250 = vadd.f32 0.0, %v1249
      %v1251 = vpop.f32.mrf.mxu0
      %v1252 = vadd.f32 0.0, %v1251
      %1253 = vmatmul.bf16.gmra.mxu0 %v1179
      %v1254 = vpop.f32.mrf.mxu0
      %v1255 = vadd.f32 0.0, %v1254
      %v1256 = vpop.f32.mrf.mxu0
      %v1257 = vadd.f32 0.0, %v1256
      %1258 = vmatmul.bf16.gmra.mxu0 %v1182
      %v1259 = vpop.f32.mrf.mxu0
      %v1260 = vadd.f32 0.0, %v1259
      %v1261 = vpop.f32.mrf.mxu0
      %v1262 = vadd.f32 0.0, %v1261
      %1263 = vmatmul.bf16.gmra.mxu0 %v1185
      %v1264 = vpop.f32.mrf.mxu0
      %v1265 = vadd.f32 0.0, %v1264
      %v1266 = vpop.f32.mrf.mxu0
      %v1267 = vadd.f32 0.0, %v1266
      %1268 = vmatmul.bf16.gmra.mxu0 %v1188
      %v1269 = vpop.f32.mrf.mxu0
      %v1270 = vadd.f32 0.0, %v1269
      %v1271 = vpop.f32.mrf.mxu0
      %v1272 = vadd.f32 0.0, %v1271
      %1273 = vmatmul.bf16.gmra.mxu0 %v1191
      %v1274 = vpop.f32.mrf.mxu0
      %v1275 = vadd.f32 0.0, %v1274
      %v1276 = vpop.f32.mrf.mxu0
      %v1277 = vadd.f32 0.0, %v1276
      %1278 = vmatmul.bf16.gmra.mxu0 %v1194
      %v1279 = vpop.f32.mrf.mxu0
      %v1280 = vadd.f32 0.0, %v1279
      %v1281 = vpop.f32.mrf.mxu0
      %v1282 = vadd.f32 0.0, %v1281
      %1283 = vmatmul.bf16.gmra.mxu0 %v1197
      %v1284 = vpop.f32.mrf.mxu0
      %v1285 = vadd.f32 0.0, %v1284
      %v1286 = vpop.f32.mrf.mxu0
      %v1287 = vadd.f32 0.0, %v1286
      %1288 = vmatmul.bf16.gmra.mxu0 %v1200
      %v1289 = vpop.f32.mrf.mxu0
      %v1290 = vadd.f32 0.0, %v1289
      %v1291 = vpop.f32.mrf.mxu0
      %v1292 = vadd.f32 0.0, %v1291
      %1293 = vmatmul.bf16.gmra.mxu0 %v1203
      %v1294 = vpop.f32.mrf.mxu0
      %v1295 = vadd.f32 0.0, %v1294
      %v1296 = vpop.f32.mrf.mxu0
      %v1297 = vadd.f32 0.0, %v1296
      %1298 = vmatmul.bf16.gmra.mxu0 %v1206
      %v1299 = vpop.f32.mrf.mxu0
      %v1300 = vadd.f32 0.0, %v1299
      %v1301 = vpop.f32.mrf.mxu0
      %v1302 = vadd.f32 0.0, %v1301
      %1303 = vdwg.mxu0
      %1304 = vmatpush.bf16.msra.mxu0 0
      %1305 = vmatpush.bf16.msra.mxu0 0
      %1306 = vmatpush.bf16.msra.mxu0 0
      %1307 = vmatpush.bf16.msra.mxu0 0
      %1308 = vmatpush.bf16.msra.mxu0 0
      %1309 = vmatpush.bf16.msra.mxu0 0
      %1310 = vmatpush.bf16.msra.mxu0 0
      %1311 = vmatpush.bf16.msra.mxu0 %v1213
      %1312 = vmatmul.bf16.gmra.mxu0 %v1161
      %v1313 = vpop.f32.mrf.mxu0
      %v1314 = vadd.f32 0.0, %v1313
      %v1315 = vpop.f32.mrf.mxu0
      %v1316 = vadd.f32 0.0, %v1315
      %1317 = vmatmul.bf16.gmra.mxu0 %v1164
      %v1318 = vpop.f32.mrf.mxu0
      %v1319 = vadd.f32 0.0, %v1318
      %v1320 = vpop.f32.mrf.mxu0
      %v1321 = vadd.f32 0.0, %v1320
      %1322 = vmatmul.bf16.gmra.mxu0 %v1167
      %v1323 = vpop.f32.mrf.mxu0
      %v1324 = vadd.f32 0.0, %v1323
      %v1325 = vpop.f32.mrf.mxu0
      %v1326 = vadd.f32 0.0, %v1325
      %1327 = vmatmul.bf16.gmra.mxu0 %v1170
      %v1328 = vpop.f32.mrf.mxu0
      %v1329 = vadd.f32 0.0, %v1328
      %v1330 = vpop.f32.mrf.mxu0
      %v1331 = vadd.f32 0.0, %v1330
      %1332 = vmatmul.bf16.gmra.mxu0 %v1173
      %v1333 = vpop.f32.mrf.mxu0
      %v1334 = vadd.f32 0.0, %v1333
      %v1335 = vpop.f32.mrf.mxu0
      %v1336 = vadd.f32 0.0, %v1335
      %1337 = vmatmul.bf16.gmra.mxu0 %v1176
      %v1338 = vpop.f32.mrf.mxu0
      %v1339 = vadd.f32 0.0, %v1338
      %v1340 = vpop.f32.mrf.mxu0
      %v1341 = vadd.f32 0.0, %v1340
      %1342 = vmatmul.bf16.gmra.mxu0 %v1179
      %v1343 = vpop.f32.mrf.mxu0
      %v1344 = vadd.f32 0.0, %v1343
      %v1345 = vpop.f32.mrf.mxu0
      %v1346 = vadd.f32 0.0, %v1345
      %1347 = vmatmul.bf16.gmra.mxu0 %v1182
      %v1348 = vpop.f32.mrf.mxu0
      %v1349 = vadd.f32 0.0, %v1348
      %v1350 = vpop.f32.mrf.mxu0
      %v1351 = vadd.f32 0.0, %v1350
      %1352 = vmatmul.bf16.gmra.mxu0 %v1185
      %v1353 = vpop.f32.mrf.mxu0
      %v1354 = vadd.f32 0.0, %v1353
      %v1355 = vpop.f32.mrf.mxu0
      %v1356 = vadd.f32 0.0, %v1355
      %1357 = vmatmul.bf16.gmra.mxu0 %v1188
      %v1358 = vpop.f32.mrf.mxu0
      %v1359 = vadd.f32 0.0, %v1358
      %v1360 = vpop.f32.mrf.mxu0
      %v1361 = vadd.f32 0.0, %v1360
      %1362 = vmatmul.bf16.gmra.mxu0 %v1191
      %v1363 = vpop.f32.mrf.mxu0
      %v1364 = vadd.f32 0.0, %v1363
      %v1365 = vpop.f32.mrf.mxu0
      %v1366 = vadd.f32 0.0, %v1365
      %1367 = vmatmul.bf16.gmra.mxu0 %v1194
      %v1368 = vpop.f32.mrf.mxu0
      %v1369 = vadd.f32 0.0, %v1368
      %v1370 = vpop.f32.mrf.mxu0
      %v1371 = vadd.f32 0.0, %v1370
      %1372 = vmatmul.bf16.gmra.mxu0 %v1197
      %v1373 = vpop.f32.mrf.mxu0
      %v1374 = vadd.f32 0.0, %v1373
      %v1375 = vpop.f32.mrf.mxu0
      %v1376 = vadd.f32 0.0, %v1375
      %1377 = vmatmul.bf16.gmra.mxu0 %v1200
      %v1378 = vpop.f32.mrf.mxu0
      %v1379 = vadd.f32 0.0, %v1378
      %v1380 = vpop.f32.mrf.mxu0
      %v1381 = vadd.f32 0.0, %v1380
      %1382 = vmatmul.bf16.gmra.mxu0 %v1203
      %v1383 = vpop.f32.mrf.mxu0
      %v1384 = vadd.f32 0.0, %v1383
      %v1385 = vpop.f32.mrf.mxu0
      %v1386 = vadd.f32 0.0, %v1385
      %1387 = vmatmul.bf16.gmra.mxu0 %v1206
      %v1388 = vpop.f32.mrf.mxu0
      %v1389 = vadd.f32 0.0, %v1388
      %v1390 = vpop.f32.mrf.mxu0
      %v1391 = vadd.f32 0.0, %v1390
      %1392 = vdwg.mxu0
      %v1393 = vmax.f32 %v1225, %v1230
      %v1394 = vmax.f32 %v1227, %v1232
      %v1395 = vmax.f32 %v1393, %v1235
      %v1396 = vmax.f32 %v1394, %v1237
      %v1397 = vmax.f32 %v1395, %v1240
      %v1398 = vmax.f32 %v1396, %v1242
      %v1399 = vmax.f32 %v1397, %v1245
      %v1400 = vmax.f32 %v1398, %v1247
      %v1401 = vmax.f32 %v1399, %v1250
      %v1402 = vmax.f32 %v1400, %v1252
      %v1403 = vmax.f32 %v1401, %v1255
      %v1404 = vmax.f32 %v1402, %v1257
      %v1405 = vmax.f32 %v1403, %v1260
      %v1406 = vmax.f32 %v1404, %v1262
      %v1407 = vmax.f32 %v1405, %v1265
      %v1408 = vmax.f32 %v1406, %v1267
      %v1409 = vmax.f32 %v1407, %v1270
      %v1410 = vmax.f32 %v1408, %v1272
      %v1411 = vmax.f32 %v1409, %v1275
      %v1412 = vmax.f32 %v1410, %v1277
      %v1413 = vmax.f32 %v1411, %v1280
      %v1414 = vmax.f32 %v1412, %v1282
      %v1415 = vmax.f32 %v1413, %v1285
      %v1416 = vmax.f32 %v1414, %v1287
      %v1417 = vmax.f32 %v1415, %v1290
      %v1418 = vmax.f32 %v1416, %v1292
      %v1419 = vmax.f32 %v1417, %v1295
      %v1420 = vmax.f32 %v1418, %v1297
      %v1421 = vmax.f32 %v1419, %v1300
      %v1422 = vmax.f32 %v1420, %v1302
      %v1423 = vmax.f32 %v1421, %v1422
      %v1424 = vrot.slane %v1423, 4
      %v1425 = vmax.f32 %v1423, %v1424
      %v1426 = vrot.slane %v1425, 2
      %v1427 = vmax.f32 %v1425, %v1426
      %v1428 = vrot.slane %v1427, 1
      %v1429 = vmax.f32 %v1427, %v1428
      %v1430 = vmax.f32 %v1314, %v1319
      %v1431 = vmax.f32 %v1316, %v1321
      %v1432 = vmax.f32 %v1430, %v1324
      %v1433 = vmax.f32 %v1431, %v1326
      %v1434 = vmax.f32 %v1432, %v1329
      %v1435 = vmax.f32 %v1433, %v1331
      %v1436 = vmax.f32 %v1434, %v1334
      %v1437 = vmax.f32 %v1435, %v1336
      %v1438 = vmax.f32 %v1436, %v1339
      %v1439 = vmax.f32 %v1437, %v1341
      %v1440 = vmax.f32 %v1438, %v1344
      %v1441 = vmax.f32 %v1439, %v1346
      %v1442 = vmax.f32 %v1440, %v1349
      %v1443 = vmax.f32 %v1441, %v1351
      %v1444 = vmax.f32 %v1442, %v1354
      %v1445 = vmax.f32 %v1443, %v1356
      %v1446 = vmax.f32 %v1444, %v1359
      %v1447 = vmax.f32 %v1445, %v1361
      %v1448 = vmax.f32 %v1446, %v1364
      %v1449 = vmax.f32 %v1447, %v1366
      %v1450 = vmax.f32 %v1448, %v1369
      %v1451 = vmax.f32 %v1449, %v1371
      %v1452 = vmax.f32 %v1450, %v1374
      %v1453 = vmax.f32 %v1451, %v1376
      %v1454 = vmax.f32 %v1452, %v1379
      %v1455 = vmax.f32 %v1453, %v1381
      %v1456 = vmax.f32 %v1454, %v1384
      %v1457 = vmax.f32 %v1455, %v1386
      %v1458 = vmax.f32 %v1456, %v1389
      %v1459 = vmax.f32 %v1457, %v1391
      %v1460 = vmax.f32 %v1458, %v1459
      %v1461 = vrot.slane %v1460, 4
      %v1462 = vmax.f32 %v1460, %v1461
      %v1463 = vrot.slane %v1462, 2
      %v1464 = vmax.f32 %v1462, %v1463
      %v1465 = vrot.slane %v1464, 1
      %v1466 = vmax.f32 %v1464, %v1465
      %v1467 = vsub.f32 %v1225, %v1429
      %v1468 = vsub.f32 %v1314, %v1466
      %v1469 = vsub.f32 %v1227, %v1429
      %v1470 = vsub.f32 %v1316, %v1466
      %v1471 = vsub.f32 %v1230, %v1429
      %v1472 = vsub.f32 %v1319, %v1466
      %v1473 = vsub.f32 %v1232, %v1429
      %v1474 = vsub.f32 %v1321, %v1466
      %v1475 = vsub.f32 %v1235, %v1429
      %v1476 = vsub.f32 %v1324, %v1466
      %v1477 = vsub.f32 %v1237, %v1429
      %v1478 = vsub.f32 %v1326, %v1466
      %v1479 = vsub.f32 %v1240, %v1429
      %v1480 = vsub.f32 %v1329, %v1466
      %v1481 = vsub.f32 %v1242, %v1429
      %v1482 = vsub.f32 %v1331, %v1466
      %v1483 = vsub.f32 %v1245, %v1429
      %v1484 = vsub.f32 %v1334, %v1466
      %v1485 = vsub.f32 %v1247, %v1429
      %v1486 = vsub.f32 %v1336, %v1466
      %v1487 = vsub.f32 %v1250, %v1429
      %v1488 = vsub.f32 %v1339, %v1466
      %v1489 = vsub.f32 %v1252, %v1429
      %v1490 = vsub.f32 %v1341, %v1466
      %v1491 = vsub.f32 %v1255, %v1429
      %v1492 = vsub.f32 %v1344, %v1466
      %v1493 = vsub.f32 %v1257, %v1429
      %v1494 = vsub.f32 %v1346, %v1466
      %v1495 = vsub.f32 %v1260, %v1429
      %v1496 = vsub.f32 %v1349, %v1466
      %v1497 = vsub.f32 %v1262, %v1429
      %v1498 = vsub.f32 %v1351, %v1466
      %v1499 = vsub.f32 %v1265, %v1429
      %v1500 = vsub.f32 %v1354, %v1466
      %v1501 = vsub.f32 %v1267, %v1429
      %v1502 = vsub.f32 %v1356, %v1466
      %v1503 = vsub.f32 %v1270, %v1429
      %v1504 = vsub.f32 %v1359, %v1466
      %v1505 = vsub.f32 %v1272, %v1429
      %v1506 = vsub.f32 %v1361, %v1466
      %v1507 = vsub.f32 %v1275, %v1429
      %v1508 = vsub.f32 %v1364, %v1466
      %v1509 = vsub.f32 %v1277, %v1429
      %v1510 = vsub.f32 %v1366, %v1466
      %v1511 = vsub.f32 %v1280, %v1429
      %v1512 = vsub.f32 %v1369, %v1466
      %v1513 = vsub.f32 %v1282, %v1429
      %v1514 = vsub.f32 %v1371, %v1466
      %v1515 = vsub.f32 %v1285, %v1429
      %v1516 = vsub.f32 %v1374, %v1466
      %v1517 = vsub.f32 %v1287, %v1429
      %v1518 = vsub.f32 %v1376, %v1466
      %v1519 = vsub.f32 %v1290, %v1429
      %v1520 = vsub.f32 %v1379, %v1466
      %v1521 = vsub.f32 %v1292, %v1429
      %v1522 = vsub.f32 %v1381, %v1466
      %v1523 = vsub.f32 %v1295, %v1429
      %v1524 = vsub.f32 %v1384, %v1466
      %v1525 = vsub.f32 %v1297, %v1429
      %v1526 = vsub.f32 %v1386, %v1466
      %v1527 = vsub.f32 %v1300, %v1429
      %v1528 = vsub.f32 %v1389, %v1466
      %v1529 = vsub.f32 %v1302, %v1429
      %v1530 = vsub.f32 %v1391, %v1466
      %v1531 = vmul.f32 %v1467, 1.442695
      %v1532 = vpow.pop %v1531
      %v1533 = vmul.f32 %v1468, 1.442695
      %v1534 = vpow.pop %v1533
      %v1535 = vmul.f32 %v1469, 1.442695
      %v1536 = vpow.pop %v1535
      %v1537 = vmul.f32 %v1470, 1.442695
      %v1538 = vpow.pop %v1537
      %v1539 = vmul.f32 %v1471, 1.442695
      %v1540 = vpow.pop %v1539
      %v1541 = vmul.f32 %v1472, 1.442695
      %v1542 = vpow.pop %v1541
      %v1543 = vmul.f32 %v1473, 1.442695
      %v1544 = vpow.pop %v1543
      %v1545 = vmul.f32 %v1474, 1.442695
      %v1546 = vpow.pop %v1545
      %v1547 = vmul.f32 %v1475, 1.442695
      %v1548 = vpow.pop %v1547
      %v1549 = vmul.f32 %v1476, 1.442695
      %v1550 = vpow.pop %v1549
      %v1551 = vmul.f32 %v1477, 1.442695
      %v1552 = vpow.pop %v1551
      %v1553 = vmul.f32 %v1478, 1.442695
      %v1554 = vpow.pop %v1553
      %v1555 = vmul.f32 %v1479, 1.442695
      %v1556 = vpow.pop %v1555
      %v1557 = vmul.f32 %v1480, 1.442695
      %v1558 = vpow.pop %v1557
      %v1559 = vmul.f32 %v1481, 1.442695
      %v1560 = vpow.pop %v1559
      %v1561 = vmul.f32 %v1482, 1.442695
      %v1562 = vpow.pop %v1561
      %v1563 = vmul.f32 %v1483, 1.442695
      %v1564 = vpow.pop %v1563
      %v1565 = vmul.f32 %v1484, 1.442695
      %v1566 = vpow.pop %v1565
      %v1567 = vmul.f32 %v1485, 1.442695
      %v1568 = vpow.pop %v1567
      %v1569 = vmul.f32 %v1486, 1.442695
      %v1570 = vpow.pop %v1569
      %v1571 = vmul.f32 %v1487, 1.442695
      %v1572 = vpow.pop %v1571
      %v1573 = vmul.f32 %v1488, 1.442695
      %v1574 = vpow.pop %v1573
      %v1575 = vmul.f32 %v1489, 1.442695
      %v1576 = vpow.pop %v1575
      %v1577 = vmul.f32 %v1490, 1.442695
      %v1578 = vpow.pop %v1577
      %v1579 = vmul.f32 %v1491, 1.442695
      %v1580 = vpow.pop %v1579
      %v1581 = vmul.f32 %v1492, 1.442695
      %v1582 = vpow.pop %v1581
      %v1583 = vmul.f32 %v1493, 1.442695
      %v1584 = vpow.pop %v1583
      %v1585 = vmul.f32 %v1494, 1.442695
      %v1586 = vpow.pop %v1585
      %v1587 = vmul.f32 %v1495, 1.442695
      %v1588 = vpow.pop %v1587
      %v1589 = vmul.f32 %v1496, 1.442695
      %v1590 = vpow.pop %v1589
      %v1591 = vmul.f32 %v1497, 1.442695
      %v1592 = vpow.pop %v1591
      %v1593 = vmul.f32 %v1498, 1.442695
      %v1594 = vpow.pop %v1593
      %v1595 = vmul.f32 %v1499, 1.442695
      %v1596 = vpow.pop %v1595
      %v1597 = vmul.f32 %v1500, 1.442695
      %v1598 = vpow.pop %v1597
      %v1599 = vmul.f32 %v1501, 1.442695
      %v1600 = vpow.pop %v1599
      %v1601 = vmul.f32 %v1502, 1.442695
      %v1602 = vpow.pop %v1601
      %v1603 = vmul.f32 %v1503, 1.442695
      %v1604 = vpow.pop %v1603
      %v1605 = vmul.f32 %v1504, 1.442695
      %v1606 = vpow.pop %v1605
      %v1607 = vmul.f32 %v1505, 1.442695
      %v1608 = vpow.pop %v1607
      %v1609 = vmul.f32 %v1506, 1.442695
      %v1610 = vpow.pop %v1609
      %v1611 = vmul.f32 %v1507, 1.442695
      %v1612 = vpow.pop %v1611
      %v1613 = vmul.f32 %v1508, 1.442695
      %v1614 = vpow.pop %v1613
      %v1615 = vmul.f32 %v1509, 1.442695
      %v1616 = vpow.pop %v1615
      %v1617 = vmul.f32 %v1510, 1.442695
      %v1618 = vpow.pop %v1617
      %v1619 = vmul.f32 %v1511, 1.442695
      %v1620 = vpow.pop %v1619
      %v1621 = vmul.f32 %v1512, 1.442695
      %v1622 = vpow.pop %v1621
      %v1623 = vmul.f32 %v1513, 1.442695
      %v1624 = vpow.pop %v1623
      %v1625 = vmul.f32 %v1514, 1.442695
      %v1626 = vpow.pop %v1625
      %v1627 = vmul.f32 %v1515, 1.442695
      %v1628 = vpow.pop %v1627
      %v1629 = vmul.f32 %v1516, 1.442695
      %v1630 = vpow.pop %v1629
      %v1631 = vmul.f32 %v1517, 1.442695
      %v1632 = vpow.pop %v1631
      %v1633 = vmul.f32 %v1518, 1.442695
      %v1634 = vpow.pop %v1633
      %v1635 = vmul.f32 %v1519, 1.442695
      %v1636 = vpow.pop %v1635
      %v1637 = vmul.f32 %v1520, 1.442695
      %v1638 = vpow.pop %v1637
      %v1639 = vmul.f32 %v1521, 1.442695
      %v1640 = vpow.pop %v1639
      %v1641 = vmul.f32 %v1522, 1.442695
      %v1642 = vpow.pop %v1641
      %v1643 = vmul.f32 %v1523, 1.442695
      %v1644 = vpow.pop %v1643
      %v1645 = vmul.f32 %v1524, 1.442695
      %v1646 = vpow.pop %v1645
      %v1647 = vmul.f32 %v1525, 1.442695
      %v1648 = vpow.pop %v1647
      %v1649 = vmul.f32 %v1526, 1.442695
      %v1650 = vpow.pop %v1649
      %v1651 = vmul.f32 %v1527, 1.442695
      %v1652 = vpow.pop %v1651
      %v1653 = vmul.f32 %v1528, 1.442695
      %v1654 = vpow.pop %v1653
      %v1655 = vmul.f32 %v1529, 1.442695
      %v1656 = vpow.pop %v1655
      %v1657 = vmul.f32 %v1530, 1.442695
      %v1658 = vpow.pop %v1657
      %v1659 = vadd.f32 %v1532, %v1536
      %v1660 = vadd.f32 %v1659, %v1540
      %v1661 = vadd.f32 %v1660, %v1544
      %v1662 = vadd.f32 %v1661, %v1548
      %v1663 = vadd.f32 %v1662, %v1552
      %v1664 = vadd.f32 %v1663, %v1556
      %v1665 = vadd.f32 %v1664, %v1560
      %v1666 = vadd.f32 %v1665, %v1564
      %v1667 = vadd.f32 %v1666, %v1568
      %v1668 = vadd.f32 %v1667, %v1572
      %v1669 = vadd.f32 %v1668, %v1576
      %v1670 = vadd.f32 %v1669, %v1580
      %v1671 = vadd.f32 %v1670, %v1584
      %v1672 = vadd.f32 %v1671, %v1588
      %v1673 = vadd.f32 %v1672, %v1592
      %v1674 = vadd.f32 %v1673, %v1596
      %v1675 = vadd.f32 %v1674, %v1600
      %v1676 = vadd.f32 %v1675, %v1604
      %v1677 = vadd.f32 %v1676, %v1608
      %v1678 = vadd.f32 %v1677, %v1612
      %v1679 = vadd.f32 %v1678, %v1616
      %v1680 = vadd.f32 %v1679, %v1620
      %v1681 = vadd.f32 %v1680, %v1624
      %v1682 = vadd.f32 %v1681, %v1628
      %v1683 = vadd.f32 %v1682, %v1632
      %v1684 = vadd.f32 %v1683, %v1636
      %v1685 = vadd.f32 %v1684, %v1640
      %v1686 = vadd.f32 %v1685, %v1644
      %v1687 = vadd.f32 %v1686, %v1648
      %v1688 = vadd.f32 %v1687, %v1652
      %v1689 = vadd.f32 %v1688, %v1656
      %v1690 = vrot.slane %v1689, 4
      %v1691 = vadd.f32 %v1689, %v1690
      %v1692 = vrot.slane %v1691, 2
      %v1693 = vadd.f32 %v1691, %v1692
      %v1694 = vrot.slane %v1693, 1
      %v1695 = vadd.f32 %v1693, %v1694
      %v1696 = vadd.f32 %v1534, %v1538
      %v1697 = vadd.f32 %v1696, %v1542
      %v1698 = vadd.f32 %v1697, %v1546
      %v1699 = vadd.f32 %v1698, %v1550
      %v1700 = vadd.f32 %v1699, %v1554
      %v1701 = vadd.f32 %v1700, %v1558
      %v1702 = vadd.f32 %v1701, %v1562
      %v1703 = vadd.f32 %v1702, %v1566
      %v1704 = vadd.f32 %v1703, %v1570
      %v1705 = vadd.f32 %v1704, %v1574
      %v1706 = vadd.f32 %v1705, %v1578
      %v1707 = vadd.f32 %v1706, %v1582
      %v1708 = vadd.f32 %v1707, %v1586
      %v1709 = vadd.f32 %v1708, %v1590
      %v1710 = vadd.f32 %v1709, %v1594
      %v1711 = vadd.f32 %v1710, %v1598
      %v1712 = vadd.f32 %v1711, %v1602
      %v1713 = vadd.f32 %v1712, %v1606
      %v1714 = vadd.f32 %v1713, %v1610
      %v1715 = vadd.f32 %v1714, %v1614
      %v1716 = vadd.f32 %v1715, %v1618
      %v1717 = vadd.f32 %v1716, %v1622
      %v1718 = vadd.f32 %v1717, %v1626
      %v1719 = vadd.f32 %v1718, %v1630
      %v1720 = vadd.f32 %v1719, %v1634
      %v1721 = vadd.f32 %v1720, %v1638
      %v1722 = vadd.f32 %v1721, %v1642
      %v1723 = vadd.f32 %v1722, %v1646
      %v1724 = vadd.f32 %v1723, %v1650
      %v1725 = vadd.f32 %v1724, %v1654
      %v1726 = vadd.f32 %v1725, %v1658
      %v1727 = vrot.slane %v1726, 4
      %v1728 = vadd.f32 %v1726, %v1727
      %v1729 = vrot.slane %v1728, 2
      %v1730 = vadd.f32 %v1728, %v1729
      %v1731 = vrot.slane %v1730, 1
      %v1732 = vadd.f32 %v1730, %v1731
      %v1733 = vpack.c.bf16 %v1107, %v1107
      %v1734 = vpack.c.bf16 %v1121, %v1121
      %v1735 = vpack.c.bf16 %v1536, %v1532
      %v1736 = vpack.c.bf16 %v1538, %v1534
      %v1737 = vpack.c.bf16 %v1544, %v1540
      %v1738 = vpack.c.bf16 %v1546, %v1542
      %v1739 = vpack.c.bf16 %v1552, %v1548
      %v1740 = vpack.c.bf16 %v1554, %v1550
      %v1741 = vpack.c.bf16 %v1560, %v1556
      %v1742 = vpack.c.bf16 %v1562, %v1558
      %v1743 = vpack.c.bf16 %v1568, %v1564
      %v1744 = vpack.c.bf16 %v1570, %v1566
      %v1745 = vpack.c.bf16 %v1576, %v1572
      %v1746 = vpack.c.bf16 %v1578, %v1574
      %v1747 = vpack.c.bf16 %v1584, %v1580
      %v1748 = vpack.c.bf16 %v1586, %v1582
      %v1749 = vpack.c.bf16 %v1592, %v1588
      %v1750 = vpack.c.bf16 %v1594, %v1590
      %v1751 = vpack.c.bf16 %v1600, %v1596
      %v1752 = vpack.c.bf16 %v1602, %v1598
      %v1753 = vpack.c.bf16 %v1608, %v1604
      %v1754 = vpack.c.bf16 %v1610, %v1606
      %v1755 = vpack.c.bf16 %v1616, %v1612
      %v1756 = vpack.c.bf16 %v1618, %v1614
      %v1757 = vpack.c.bf16 %v1624, %v1620
      %v1758 = vpack.c.bf16 %v1626, %v1622
      %v1759 = vpack.c.bf16 %v1632, %v1628
      %v1760 = vpack.c.bf16 %v1634, %v1630
      %v1761 = vpack.c.bf16 %v1640, %v1636
      %v1762 = vpack.c.bf16 %v1642, %v1638
      %v1763 = vpack.c.bf16 %v1648, %v1644
      %v1764 = vpack.c.bf16 %v1650, %v1646
      %v1765 = vpack.c.bf16 %v1656, %v1652
      %v1766 = vpack.c.bf16 %v1658, %v1654
      %1767 = vmatpush.bf16.msra.mxu0 %v1749
      %1768 = vmatpush.bf16.msra.mxu0 %v1747
      %1769 = vmatpush.bf16.msra.mxu0 %v1745
      %1770 = vmatpush.bf16.msra.mxu0 %v1743
      %1771 = vmatpush.bf16.msra.mxu0 %v1741
      %1772 = vmatpush.bf16.msra.mxu0 %v1739
      %1773 = vmatpush.bf16.msra.mxu0 %v1737
      %1774 = vmatpush.bf16.msra.mxu0 %v1735
      %1775 = vmatmul.bf16.gmra.mxu0 %v1733
      %v1776 = vpop.f32.mrf.mxu0
      %v1777 = vadd.f32 0.0, %v1776
      %v1778 = vpop.f32.mrf.mxu0
      %1779 = vdwg.mxu0
      %1780 = vmatpush.bf16.msra.mxu0 %v1765
      %1781 = vmatpush.bf16.msra.mxu0 %v1763
      %1782 = vmatpush.bf16.msra.mxu0 %v1761
      %1783 = vmatpush.bf16.msra.mxu0 %v1759
      %1784 = vmatpush.bf16.msra.mxu0 %v1757
      %1785 = vmatpush.bf16.msra.mxu0 %v1755
      %1786 = vmatpush.bf16.msra.mxu0 %v1753
      %1787 = vmatpush.bf16.msra.mxu0 %v1751
      %1788 = vmatmul.bf16.gmra.mxu0 %v1734
      %v1789 = vpop.f32.mrf.mxu0
      %v1790 = vadd.f32 %v1777, %v1789
      %v1791 = vpop.f32.mrf.mxu0
      %1792 = vdwg.mxu0
      %1793 = vmatpush.bf16.msra.mxu0 %v1750
      %1794 = vmatpush.bf16.msra.mxu0 %v1748
      %1795 = vmatpush.bf16.msra.mxu0 %v1746
      %1796 = vmatpush.bf16.msra.mxu0 %v1744
      %1797 = vmatpush.bf16.msra.mxu0 %v1742
      %1798 = vmatpush.bf16.msra.mxu0 %v1740
      %1799 = vmatpush.bf16.msra.mxu0 %v1738
      %1800 = vmatpush.bf16.msra.mxu0 %v1736
      %1801 = vmatmul.bf16.gmra.mxu0 %v1733
      %v1802 = vpop.f32.mrf.mxu0
      %v1803 = vadd.f32 0.0, %v1802
      %v1804 = vpop.f32.mrf.mxu0
      %1805 = vdwg.mxu0
      %1806 = vmatpush.bf16.msra.mxu0 %v1766
      %1807 = vmatpush.bf16.msra.mxu0 %v1764
      %1808 = vmatpush.bf16.msra.mxu0 %v1762
      %1809 = vmatpush.bf16.msra.mxu0 %v1760
      %1810 = vmatpush.bf16.msra.mxu0 %v1758
      %1811 = vmatpush.bf16.msra.mxu0 %v1756
      %1812 = vmatpush.bf16.msra.mxu0 %v1754
      %1813 = vmatpush.bf16.msra.mxu0 %v1752
      %1814 = vmatmul.bf16.gmra.mxu0 %v1734
      %v1815 = vpop.f32.mrf.mxu0
      %v1816 = vadd.f32 %v1803, %v1815
      %v1817 = vpop.f32.mrf.mxu0
      %1818 = vdwg.mxu0
      %v1819 = vrcp.pop %v1695
      %v1820 = vrcp.pop %v1732
      %v1821 = vmul.f32 %v1790, %v1819
      %v1822 = vmul.f32 %v1816, %v1820
      %s1823 = sld [smem:[#allocation2]]
      %v1824 = vstv %s1823
      %v1825 = vmul.f32 %v1824, %v1821
      %v1826 = vmul.f32 %v1824, %v1822
      %v1827 = vadd.f32 %v1825, %v1063
      %v1828 = vadd.f32 %v1826, %v1064
      %v1829 = vadd.f32 %v1827, %v364
      %v1830 = vadd.f32 %v1828, %v365
      %v1831 = vmax.f32 %v1829, 0.0
      %v1832 = vmax.f32 %v1830, 0.0
      %1833 = vst [vmem:[%s360] sm:$0xff] %v1831
      %1834 = vst [vmem:[%s360 + $0x8] sm:$0xff] %v1832
      %p1835 = scmp.lt.s32.totalorder %s22, 1
      %s1836 = scalar_select %p1835, %s22, 1
      %s1837 = smul.addr %s1836, 2
      %s1838 = smul.addr %s1837, 8
      %s1839 = scalar_lea.vmem %s10, %s1838
      // Predicated region
      $region61: #{residual_block_forward.1} parent=59 // pred_check
        %p1840 = pneg %p255
      $region62: #{residual_block_forward.1} parent=59 // pred_check_branch
        %1842 = sbr.rel (%p1840) target = $region64
      $region63: #{residual_block_forward.1} parent=59 // pred_region
        _
      $region64: #{residual_block_forward.1} parent=59 // pred_fallthru
        _
    $region60: #{residual_block_forward.1} parent=5 // pred_fallthru
      _
    %p1843 = scmp.le.s32.totalorder 2, %s17
    // Predicated region
    $region65: #{residual_block_forward.1} parent=5 // pred_check
      %p1844 = pneg %p1843
    $region66: #{residual_block_forward.1} parent=5 // pred_check_branch
      %1846 = sbr.rel (%p1844) target = $region68
    $region67: #{residual_block_forward.1} parent=5 // pred_region
      %s1847 = ssub.s32 %s17, 2
      // Predicated region
      $region69: #{residual_block_forward.1} parent=67 // pred_check
        %p1848 = pneg %p261
      $region70: #{residual_block_forward.1} parent=67 // pred_check_branch
        %1850 = sbr.rel (%p1848) target = $region72
      $region71: #{residual_block_forward.1} parent=67 // pred_region
        %p1851 = scmp.lt.s32.totalorder %s23, 1
        %s1852 = scalar_select %p1851, %s23, 1
        %s1853 = smul.addr %s1852, 2
        %s1854 = smul.addr %s1853, 8
        %s1855 = scalar_lea.vmem %s10, %s1854
      $region72: #{residual_block_forward.1} parent=67 // pred_fallthru
        _
    $region68: #{residual_block_forward.1} parent=5 // pred_fallthru
      _
  $region6: #{residual_block_forward.1} parent=0 // loop_footer
    %s21 = sadd.s32 1, %s17
  $region7: #{residual_block_forward.1} parent=0 // loop_footer_branch
    %16 = sbr.rel target = $region3
  $region8: #{residual_block_forward.1} parent=0 // loop_exit
    _

</llo_original>
